<compile_context>
chip_gen: v6e
topology: v6e:2x2x1
jax: 0.10.0
libtpu: 0.0.40
codegen_flags: <defaults>
</compile_context>

<pallas_src>
import functools

import jax
import jax.numpy as jnp
from jax.experimental import pallas as pl
from jax.experimental.pallas import tpu as pltpu

BN_EPS = 1e-5
_HIGHEST = jax.lax.Precision.HIGHEST


def _vmem_budget_bytes():
    """Generation-aware VMEM budget (v7x: 64 MiB physical; v5e/v6e: 128 MiB)."""
    cap = 64 * 1024 * 1024  # conservative fallback (v7x-sized)
    try:
        info = pltpu.get_tpu_info()
        cap = int(getattr(info, "vmem_capacity_bytes", cap))
    except Exception:
        pass
    return min(96 * 1024 * 1024, (cap * 3) // 4)


# -----------------------------------------------------------------------------
# Fused one-call kernel: grid = (phase, batch_tile).
#   phase 0: stream x, compute z = x @ W1, cache z in VMEM, accumulate stats,
#            finalize BN scale/shift on the last tile.
#   phase 1: read cached z, apply BN + ReLU + fused heads + sigmoid, store.
# -----------------------------------------------------------------------------
def _fused_kernel(x_ref, w1_ref, gamma_ref, beta_ref, wh_ref, bh_ref, out_ref,
                  zcache_ref, sum_ref, sumsq_ref, scale_ref, shift_ref,
                  *, inv_batch):
    phase = pl.program_id(0)
    i = pl.program_id(1)
    n_tiles = pl.num_programs(1)
    tb = x_ref.shape[0]
    row0 = pl.multiple_of(i * tb, 8)

    @pl.when(phase == 0)
    def _stats_phase():
        @pl.when(i == 0)
        def _init():
            sum_ref[...] = jnp.zeros_like(sum_ref)
            sumsq_ref[...] = jnp.zeros_like(sumsq_ref)

        x = x_ref[...].astype(jnp.bfloat16)                               # [tb, Fin]
        z = jnp.dot(x, w1_ref[...], preferred_element_type=jnp.float32)  # [tb, H] f32
        zcache_ref[pl.ds(row0, tb), :] = z

        # Column sums on the MXU (idle otherwise). HIGHEST precision keeps the
        # f32 operands un-truncated so E[z^2] - E[z]^2 stays accurate.
        ones = jnp.ones((1, tb), jnp.float32)
        sum_ref[...] += jnp.dot(ones, z, preferred_element_type=jnp.float32,
                                precision=_HIGHEST)
        sumsq_ref[...] += jnp.dot(ones, z * z, preferred_element_type=jnp.float32,
                                  precision=_HIGHEST)

        @pl.when(i == n_tiles - 1)
        def _finalize():
            mean = sum_ref[...] * inv_batch
            var = jnp.maximum(sumsq_ref[...] * inv_batch - mean * mean, 0.0)
            sc = gamma_ref[...] * jax.lax.rsqrt(var + BN_EPS)
            scale_ref[...] = sc
            shift_ref[...] = beta_ref[...] - mean * sc

    @pl.when(phase == 1)
    def _apply_phase():
        z = zcache_ref[pl.ds(row0, tb), :]                                # [tb, H] f32
        base = jnp.maximum(z * scale_ref[...] + shift_ref[...], 0.0)
        heads = jnp.dot(base.astype(jnp.bfloat16), wh_ref[...],
                        preferred_element_type=jnp.float32) + bh_ref[...]
        out_ref[...] = jax.nn.sigmoid(heads).astype(out_ref.dtype)


# -----------------------------------------------------------------------------
# Two-pass fallback (huge batches whose z-cache would not fit VMEM).
# -----------------------------------------------------------------------------
def _stats_kernel(x_ref, w1_ref, gamma_ref, beta_ref, scale_ref, shift_ref,
                  sum_ref, sumsq_ref, *, inv_batch):
    i = pl.program_id(0)

    @pl.when(i == 0)
    def _init():
        sum_ref[...] = jnp.zeros_like(sum_ref)
        sumsq_ref[...] = jnp.zeros_like(sumsq_ref)

    x = x_ref[...].astype(jnp.bfloat16)
    z = jnp.dot(x, w1_ref[...], preferred_element_type=jnp.float32)       # [tb, H]
    ones = jnp.ones((1, z.shape[0]), jnp.float32)
    sum_ref[...] += jnp.dot(ones, z, preferred_element_type=jnp.float32,
                            precision=_HIGHEST)
    sumsq_ref[...] += jnp.dot(ones, z * z, preferred_element_type=jnp.float32,
                              precision=_HIGHEST)

    @pl.when(i == pl.num_programs(0) - 1)
    def _finalize():
        mean = sum_ref[...] * inv_batch
        var = jnp.maximum(sumsq_ref[...] * inv_batch - mean * mean, 0.0)
        sc = gamma_ref[...] * jax.lax.rsqrt(var + BN_EPS)
        scale_ref[...] = sc
        shift_ref[...] = beta_ref[...] - mean * sc


def _heads_kernel(x_ref, w1_ref, scale_ref, shift_ref, wh_ref, bh_ref, out_ref):
    x = x_ref[...].astype(jnp.bfloat16)
    z = jnp.dot(x, w1_ref[...], preferred_element_type=jnp.float32)
    base = jnp.maximum(z * scale_ref[...] + shift_ref[...], 0.0)
    heads = jnp.dot(base.astype(jnp.bfloat16), wh_ref[...],
                    preferred_element_type=jnp.float32) + bh_ref[...]
    out_ref[...] = jax.nn.sigmoid(heads).astype(out_ref.dtype)


# -----------------------------------------------------------------------------
# Wrapper
# -----------------------------------------------------------------------------
def prepare_params(params):
    """One-time layout / fusion / cast of the PyTorch-layout parameters."""
    return {
        "w1": params["w1"].T.astype(jnp.bfloat16),                             # [Fin, H]
        "w_heads": jnp.concatenate([params["wh"].T, params["wr"].T],
                                   axis=1).astype(jnp.bfloat16),                # [H, 2*out]
        "b_heads": jnp.concatenate([params["bh"], params["br"]])[None]
                     .astype(jnp.float32),                                      # [1, 2*out]
        "gamma": params["gamma"][None].astype(jnp.float32),                     # [1, H]
        "beta": params["beta"][None].astype(jnp.float32),                       # [1, H]
    }


def projectile_forward(x, prepared, *, batch_tile=None, force_two_pass=False):
    """x: [B, in_features] float32; prepared: prepare_params(...). Returns (h, r)."""
    B, in_features = x.shape
    w1 = prepared["w1"]
    w_heads = prepared["w_heads"]
    b_heads = prepared["b_heads"]
    gamma, beta = prepared["gamma"], prepared["beta"]
    hidden = w1.shape[1]
    out2 = w_heads.shape[1]
    out_features = out2 // 2

    budget = _vmem_budget_bytes()
    if batch_tile is None:
        batch_tile = 8192 if budget >= 80 * 1024 * 1024 else 4096
    batch_tile = max(8, ((int(batch_tile) + 7) // 8) * 8)   # sublane-aligned tiles

    b8 = ((B + 7) // 8) * 8
    tb = min(batch_tile, b8)
    b_pad = ((b8 + tb - 1) // tb) * tb
    if b_pad != B:
        x = jnp.pad(x, ((0, b_pad - B), (0, 0)))   # zero rows contribute 0 to the sums
    num_tiles = b_pad // tb
    inv_batch = 1.0 / B

    # Rough VMEM footprint of the one-call z-cache path (lane-padded layouts):
    #   z-cache ~512 B/row over the whole padded batch, streaming buffers +
    #   f32 intermediates ~6 KiB per tile row.
    zcache_bytes = b_pad * 128 * 4
    stream_bytes = tb * 6 * 1024
    use_fused = (not force_two_pass) and (zcache_bytes + stream_bytes <= budget)

    cparams = lambda sem: pltpu.CompilerParams(
        dimension_semantics=sem, vmem_limit_bytes=budget)

    if use_fused:
        fused = pl.pallas_call(
            functools.partial(_fused_kernel, inv_batch=inv_batch),
            out_shape=jax.ShapeDtypeStruct((b_pad, out2), jnp.float32),
            grid=(2, num_tiles),
            in_specs=[
                # x is streamed in phase 0 and pinned to block 0 in phase 1
                # (unused there), so it is read from HBM only once.
                pl.BlockSpec((tb, in_features), lambda p, i: (i * (1 - p), 0)),
                pl.BlockSpec((in_features, hidden), lambda p, i: (0, 0)),
                pl.BlockSpec((1, hidden), lambda p, i: (0, 0)),
                pl.BlockSpec((1, hidden), lambda p, i: (0, 0)),
                pl.BlockSpec((hidden, out2), lambda p, i: (0, 0)),
                pl.BlockSpec((1, out2), lambda p, i: (0, 0)),
            ],
            out_specs=pl.BlockSpec((tb, out2), lambda p, i: (i * p, 0)),
            scratch_shapes=[
                pltpu.VMEM((b_pad, hidden), jnp.float32),   # z cache
                pltpu.VMEM((1, hidden), jnp.float32),       # sum(z)
                pltpu.VMEM((1, hidden), jnp.float32),       # sum(z*z)
                pltpu.VMEM((1, hidden), jnp.float32),       # BN scale
                pltpu.VMEM((1, hidden), jnp.float32),       # BN shift
            ],
            compiler_params=cparams(("arbitrary", "arbitrary")),
        )(x, w1, gamma, beta, w_heads, b_heads)
    else:
        # Pass 1: batch statistics -> folded BN scale/shift.
        scale, shift = pl.pallas_call(
            functools.partial(_stats_kernel, inv_batch=inv_batch),
            out_shape=(jax.ShapeDtypeStruct((1, hidden), jnp.float32),
                       jax.ShapeDtypeStruct((1, hidden), jnp.float32)),
            grid=(num_tiles,),
            in_specs=[
                pl.BlockSpec((tb, in_features), lambda i: (i, 0)),
                pl.BlockSpec((in_features, hidden), lambda i: (0, 0)),
                pl.BlockSpec((1, hidden), lambda i: (0, 0)),
                pl.BlockSpec((1, hidden), lambda i: (0, 0)),
            ],
            out_specs=(pl.BlockSpec((1, hidden), lambda i: (0, 0)),
                       pl.BlockSpec((1, hidden), lambda i: (0, 0))),
            scratch_shapes=[pltpu.VMEM((1, hidden), jnp.float32),
                            pltpu.VMEM((1, hidden), jnp.float32)],
            compiler_params=cparams(("arbitrary",)),
        )(x, w1, gamma, beta)

        # Pass 2: normalize + fused heads, fully parallel over batch tiles.
        fused = pl.pallas_call(
            _heads_kernel,
            out_shape=jax.ShapeDtypeStruct((b_pad, out2), jnp.float32),
            grid=(num_tiles,),
            in_specs=[
                pl.BlockSpec((tb, in_features), lambda i: (i, 0)),
                pl.BlockSpec((in_features, hidden), lambda i: (0, 0)),
                pl.BlockSpec((1, hidden), lambda i: (0, 0)),
                pl.BlockSpec((1, hidden), lambda i: (0, 0)),
                pl.BlockSpec((hidden, out2), lambda i: (0, 0)),
                pl.BlockSpec((1, out2), lambda i: (0, 0)),
            ],
            out_specs=pl.BlockSpec((tb, out2), lambda i: (i, 0)),
            compiler_params=cparams(("parallel",)),
        )(x, w1, scale, shift, w_heads, b_heads)

    h = fused[:B, :out_features]
    r = fused[:B, out_features:]
    return h, r


projectile_forward_jit = jax.jit(
    projectile_forward, static_argnames=("batch_tile", "force_two_pass"))


# -----------------------------------------------------------------------------
# Parameters + references
# -----------------------------------------------------------------------------
def init_params(key, in_features, hidden_features, out_features):
    """Deterministic synthetic parameters (PyTorch-style layouts)."""
    k1, k2, k3, k4, k5 = jax.random.split(key, 5)
    return {
        "w1": jax.random.normal(k1, (hidden_features, in_features), jnp.float32) * 0.1,
        "gamma": jnp.ones((hidden_features,), jnp.float32),
        "beta": jnp.zeros((hidden_features,), jnp.float32),
        "wh": jax.random.normal(k2, (out_features, hidden_features), jnp.float32) * 0.1,
        "bh": jax.random.normal(k3, (out_features,), jnp.float32) * 0.1,
        "wr": jax.random.normal(k4, (out_features, hidden_features), jnp.float32) * 0.1,
        "br": jax.random.normal(k5, (out_features,), jnp.float32) * 0.1,
    }


def reference_forward_f32(x, params):
    """Pure-f32 JAX reference mirroring the PyTorch forward (training-mode BN)."""
    z = x @ params["w1"].T
    mean = jnp.mean(z, axis=0, keepdims=True)
    var = jnp.mean((z - mean) ** 2, axis=0, keepdims=True)
    base = jnp.maximum((z - mean) * jax.lax.rsqrt(var + BN_EPS) * params["gamma"][None]
                       + params["beta"][None], 0.0)
    h = jax.nn.sigmoid(base @ params["wh"].T + params["bh"][None])
    r = jax.nn.sigmoid(base @ params["wr"].T + params["br"][None])
    return h, r


def reference_forward_matched(x, params):
    """Reference using the same bf16-MXU / f32-accumulate recipe as the kernels."""
    out_features = params["wh"].shape[0]
    B = x.shape[0]
    w1 = params["w1"].T.astype(jnp.bfloat16)
    z = jnp.dot(x.astype(jnp.bfloat16), w1, preferred_element_type=jnp.float32)
    mean = jnp.sum(z, axis=0, keepdims=True) / B
    ex2 = jnp.sum(z * z, axis=0, keepdims=True) / B
    var = jnp.maximum(ex2 - mean * mean, 0.0)
    scale = params["gamma"][None] * jax.lax.rsqrt(var + BN_EPS)
    shift = params["beta"][None] - mean * scale
    base = jnp.maximum(z * scale + shift, 0.0)
    w_heads = jnp.concatenate([params["wh"].T, params["wr"].T], axis=1).astype(jnp.bfloat16)
    b_heads = jnp.concatenate([params["bh"], params["br"]])[None]
    heads = jax.nn.sigmoid(jnp.dot(base.astype(jnp.bfloat16), w_heads,
                                   preferred_element_type=jnp.float32) + b_heads)
    return heads[:, :out_features], heads[:, out_features:]


if __name__ == "__main__":
    key = jax.random.PRNGKey(0)
    kx, kx2, kp = jax.random.split(key, 3)

    B, in_features, hidden_features, out_features = 8, 16, 32, 4
    x = jax.random.normal(kx, (B, in_features), jnp.float32)
    params = init_params(kp, in_features, hidden_features, out_features)
    prepared = prepare_params(params)

    # Fused single-tile path (the common case).
    h, r = projectile_forward_jit(x, prepared)
    jax.block_until_ready((h, r))
    assert h.shape == (B, out_features) and r.shape == (B, out_features)

    # Semantic check vs. the pure-f32 PyTorch-equivalent reference (loose
    # tolerance accounts for intentional bf16 MXU inputs with f32 accumulation).
    h32, r32 = reference_forward_f32(x, params)
    assert jnp.allclose(h, h32, atol=2e-2, rtol=2e-2), "h mismatch vs f32 reference"
    assert jnp.allclose(r, r32, atol=2e-2, rtol=2e-2), "r mismatch vs f32 reference"

    # Tight check vs. a reference using the same bf16/f32 numerics as the kernel.
    hb, rb = reference_forward_matched(x, params)
    assert jnp.allclose(h, hb, atol=2e-3, rtol=2e-3), "h mismatch vs matched reference"
    assert jnp.allclose(r, rb, atol=2e-3, rtol=2e-3), "r mismatch vs matched reference"

    # Multi-tile fused z-cache path (B not a multiple of the tile, with padding).
    B2 = 200
    x2 = jax.random.normal(kx2, (B2, in_features), jnp.float32)
    h2, r2 = projectile_forward_jit(x2, prepared, batch_tile=64)
    jax.block_until_ready((h2, r2))
    h2b, r2b = reference_forward_matched(x2, params)
    assert h2.shape == (B2, out_features) and r2.shape == (B2, out_features)
    assert jnp.allclose(h2, h2b, atol=2e-3, rtol=2e-3), "h mismatch (fused multi-tile)"
    assert jnp.allclose(r2, r2b, atol=2e-3, rtol=2e-3), "r mismatch (fused multi-tile)"

    # Two-pass streaming fallback (used automatically when the z-cache would
    # not fit VMEM); forced here so the path is exercised on-device.
    h3, r3 = projectile_forward_jit(x2, prepared, batch_tile=64, force_two_pass=True)
    jax.block_until_ready((h3, r3))
    assert jnp.allclose(h3, h2b, atol=2e-3, rtol=2e-3), "h mismatch (two-pass fallback)"
    assert jnp.allclose(r3, r2b, atol=2e-3, rtol=2e-3), "r mismatch (two-pass fallback)"

    print("KERNEL_OK")
</pallas_src>

<mosaic_0001>
module attributes {stable_mosaic.version = 11 : i64} {
  func.func @_fused_kernel(%arg0: i32, %arg1: i32, %arg2: memref<8x16xf32, #tpu.memory_space<vmem>>, %arg3: memref<16x32xbf16, #tpu.memory_space<vmem>>, %arg4: memref<1x32xf32, #tpu.memory_space<vmem>>, %arg5: memref<1x32xf32, #tpu.memory_space<vmem>>, %arg6: memref<32x8xbf16, #tpu.memory_space<vmem>>, %arg7: memref<1x8xf32, #tpu.memory_space<vmem>>, %arg8: memref<8x8xf32, #tpu.memory_space<vmem>>, %arg9: memref<8x32xf32, #tpu.memory_space<vmem>>, %arg10: memref<1x32xf32, #tpu.memory_space<vmem>>, %arg11: memref<1x32xf32, #tpu.memory_space<vmem>>, %arg12: memref<1x32xf32, #tpu.memory_space<vmem>>, %arg13: memref<1x32xf32, #tpu.memory_space<vmem>>) attributes {dimension_semantics = [#tpu.dimension_semantics<arbitrary>, #tpu.dimension_semantics<arbitrary>], iteration_bounds = array<i64: 2, 1>, scalar_prefetch = 0 : i64, scratch_operands = 5 : i64, tpu.core_type = #tpu.core_type<tc>, window_params = [{transform_indices = @transform_0, window_bounds = array<i64: 8, 16>}, {pipeline_mode = #tpu.pipeline_mode<synchronous>, transform_indices = @transform_1, window_bounds = array<i64: 16, 32>}, {pipeline_mode = #tpu.pipeline_mode<synchronous>, transform_indices = @transform_2, window_bounds = array<i64: 1, 32>}, {pipeline_mode = #tpu.pipeline_mode<synchronous>, transform_indices = @transform_3, window_bounds = array<i64: 1, 32>}, {pipeline_mode = #tpu.pipeline_mode<synchronous>, transform_indices = @transform_4, window_bounds = array<i64: 32, 8>}, {pipeline_mode = #tpu.pipeline_mode<synchronous>, transform_indices = @transform_5, window_bounds = array<i64: 1, 8>}, {transform_indices = @transform_6, window_bounds = array<i64: 8, 8>}]} {
    %c8_i32 = arith.constant 8 : i32
    %0 = arith.muli %arg1, %c8_i32 : i32
    %1 = tpu.assume_multiple %0, 8 : i32
    %c0_i32 = arith.constant 0 : i32
    %2 = arith.cmpi eq, %arg0, %c0_i32 : i32
    %3 = arith.extui %2 : i1 to i32
    %c0_i32_0 = arith.constant 0 : i32
    %4 = arith.cmpi ne, %3, %c0_i32_0 : i32
    scf.if %4 {
      %c0_i32_2 = arith.constant 0 : i32
      %8 = arith.cmpi eq, %arg1, %c0_i32_2 : i32
      %9 = arith.extui %8 : i1 to i32
      %c0_i32_3 = arith.constant 0 : i32
      %10 = arith.cmpi ne, %9, %c0_i32_3 : i32
      scf.if %10 {
        %cst_21 = arith.constant 0.000000e+00 : f32
        %30 = vector.broadcast %cst_21 : f32 to vector<1x32xf32>
        %c0_22 = arith.constant 0 : index
        %c0_23 = arith.constant 0 : index
        %31 = vector.load %arg10[%c0_22, %c0_23] : memref<1x32xf32, #tpu.memory_space<vmem>>, vector<1x32xf32>
        tpu.vector_store %arg10[%c0_22, %c0_23], %30 {strides = array<i32>} : memref<1x32xf32, #tpu.memory_space<vmem>>, vector<1x32xf32>,
        %cst_24 = arith.constant 0.000000e+00 : f32
        %32 = vector.broadcast %cst_24 : f32 to vector<1x32xf32>
        %c0_25 = arith.constant 0 : index
        %c0_26 = arith.constant 0 : index
        %33 = vector.load %arg11[%c0_25, %c0_26] : memref<1x32xf32, #tpu.memory_space<vmem>>, vector<1x32xf32>
        tpu.vector_store %arg11[%c0_25, %c0_26], %32 {strides = array<i32>} : memref<1x32xf32, #tpu.memory_space<vmem>>, vector<1x32xf32>,
      } else {
      }
      %c0 = arith.constant 0 : index
      %c0_4 = arith.constant 0 : index
      %11 = vector.load %arg2[%c0, %c0_4] : memref<8x16xf32, #tpu.memory_space<vmem>>, vector<8x16xf32>
      %12 = arith.truncf %11 : vector<8x16xf32> to vector<8x16xbf16>
      %c0_5 = arith.constant 0 : index
      %c0_6 = arith.constant 0 : index
      %13 = vector.load %arg3[%c0_5, %c0_6] : memref<16x32xbf16, #tpu.memory_space<vmem>>, vector<16x32xbf16>
      %cst = arith.constant dense<0.000000e+00> : vector<8x32xf32>
      %14 = tpu.matmul %12, %13, %cst {dimension_numbers = #tpu.dot_dimension_numbers<[1], [0], [0], [1], [0, 0, 1, 1], [], []>} : vector<8x16xbf16>, vector<16x32xbf16>, vector<8x32xf32> -> vector<8x32xf32>
      %15 = arith.index_cast %1 : i32 to index
      %c0_7 = arith.constant 0 : index
      %16 = vector.load %arg9[%15, %c0_7] : memref<8x32xf32, #tpu.memory_space<vmem>>, vector<8x32xf32>
      tpu.vector_store %arg9[%15, %c0_7], %14 {strides = array<i32>} : memref<8x32xf32, #tpu.memory_space<vmem>>, vector<8x32xf32>,
      %cst_8 = arith.constant 1.000000e+00 : f32
      %17 = vector.broadcast %cst_8 : f32 to vector<1x8xf32>
      %c0_9 = arith.constant 0 : index
      %c0_10 = arith.constant 0 : index
      %18 = vector.load %arg10[%c0_9, %c0_10] : memref<1x32xf32, #tpu.memory_space<vmem>>, vector<1x32xf32>
      %cst_11 = arith.constant dense<0.000000e+00> : vector<1x32xf32>
      %19 = tpu.matmul %17, %14, %cst_11 {dimension_numbers = #tpu.dot_dimension_numbers<[1], [0], [0], [1], [0, 0, 1, 1], [], []>, precision = #tpu.contract_precision<fp32>} : vector<1x8xf32>, vector<8x32xf32>, vector<1x32xf32> -> vector<1x32xf32>
      %20 = arith.addf %18, %19 : vector<1x32xf32>
      %c0_12 = arith.constant 0 : index
      %c0_13 = arith.constant 0 : index
      %21 = vector.load %arg10[%c0_12, %c0_13] : memref<1x32xf32, #tpu.memory_space<vmem>>, vector<1x32xf32>
      tpu.vector_store %arg10[%c0_12, %c0_13], %20 {strides = array<i32>} : memref<1x32xf32, #tpu.memory_space<vmem>>, vector<1x32xf32>,
      %c0_14 = arith.constant 0 : index
      %c0_15 = arith.constant 0 : index
      %22 = vector.load %arg11[%c0_14, %c0_15] : memref<1x32xf32, #tpu.memory_space<vmem>>, vector<1x32xf32>
      %23 = arith.mulf %14, %14 : vector<8x32xf32>
      %cst_16 = arith.constant dense<0.000000e+00> : vector<1x32xf32>
      %24 = tpu.matmul %17, %23, %cst_16 {dimension_numbers = #tpu.dot_dimension_numbers<[1], [0], [0], [1], [0, 0, 1, 1], [], []>, precision = #tpu.contract_precision<fp32>} : vector<1x8xf32>, vector<8x32xf32>, vector<1x32xf32> -> vector<1x32xf32>
      %25 = arith.addf %22, %24 : vector<1x32xf32>
      %c0_17 = arith.constant 0 : index
      %c0_18 = arith.constant 0 : index
      %26 = vector.load %arg11[%c0_17, %c0_18] : memref<1x32xf32, #tpu.memory_space<vmem>>, vector<1x32xf32>
      tpu.vector_store %arg11[%c0_17, %c0_18], %25 {strides = array<i32>} : memref<1x32xf32, #tpu.memory_space<vmem>>, vector<1x32xf32>,
      %c0_i32_19 = arith.constant 0 : i32
      %27 = arith.cmpi eq, %arg1, %c0_i32_19 : i32
      %28 = arith.extui %27 : i1 to i32
      %c0_i32_20 = arith.constant 0 : i32
      %29 = arith.cmpi ne, %28, %c0_i32_20 : i32
      scf.if %29 {
        %c0_21 = arith.constant 0 : index
        %c0_22 = arith.constant 0 : index
        %30 = vector.load %arg10[%c0_21, %c0_22] : memref<1x32xf32, #tpu.memory_space<vmem>>, vector<1x32xf32>
        %cst_23 = arith.constant 1.250000e-01 : f32
        %31 = vector.broadcast %cst_23 : f32 to vector<1x32xf32>
        %32 = arith.mulf %30, %31 : vector<1x32xf32>
        %c0_24 = arith.constant 0 : index
        %c0_25 = arith.constant 0 : index
        %33 = vector.load %arg11[%c0_24, %c0_25] : memref<1x32xf32, #tpu.memory_space<vmem>>, vector<1x32xf32>
        %cst_26 = arith.constant 1.250000e-01 : f32
        %34 = vector.broadcast %cst_26 : f32 to vector<1x32xf32>
        %35 = arith.mulf %33, %34 : vector<1x32xf32>
        %36 = arith.mulf %32, %32 : vector<1x32xf32>
        %37 = arith.subf %35, %36 : vector<1x32xf32>
        %cst_27 = arith.constant 0.000000e+00 : f32
        %38 = vector.broadcast %cst_27 : f32 to vector<1x32xf32>
        %39 = arith.maximumf %37, %38 : vector<1x32xf32>
        %c0_28 = arith.constant 0 : index
        %c0_29 = arith.constant 0 : index
        %40 = vector.load %arg4[%c0_28, %c0_29] : memref<1x32xf32, #tpu.memory_space<vmem>>, vector<1x32xf32>
        %cst_30 = arith.constant 9.99999974E-6 : f32
        %41 = vector.broadcast %cst_30 : f32 to vector<1x32xf32>
        %42 = arith.addf %39, %41 : vector<1x32xf32>
        %43 = math.rsqrt %42 : vector<1x32xf32>
        %44 = arith.mulf %40, %43 : vector<1x32xf32>
        %c0_31 = arith.constant 0 : index
        %c0_32 = arith.constant 0 : index
        %45 = vector.load %arg12[%c0_31, %c0_32] : memref<1x32xf32, #tpu.memory_space<vmem>>, vector<1x32xf32>
        tpu.vector_store %arg12[%c0_31, %c0_32], %44 {strides = array<i32>} : memref<1x32xf32, #tpu.memory_space<vmem>>, vector<1x32xf32>,
        %c0_33 = arith.constant 0 : index
        %c0_34 = arith.constant 0 : index
        %46 = vector.load %arg5[%c0_33, %c0_34] : memref<1x32xf32, #tpu.memory_space<vmem>>, vector<1x32xf32>
        %47 = arith.mulf %32, %44 : vector<1x32xf32>
        %48 = arith.subf %46, %47 : vector<1x32xf32>
        %c0_35 = arith.constant 0 : index
        %c0_36 = arith.constant 0 : index
        %49 = vector.load %arg13[%c0_35, %c0_36] : memref<1x32xf32, #tpu.memory_space<vmem>>, vector<1x32xf32>
        tpu.vector_store %arg13[%c0_35, %c0_36], %48 {strides = array<i32>} : memref<1x32xf32, #tpu.memory_space<vmem>>, vector<1x32xf32>,
      } else {
      }
    } else {
    }
    %c1_i32 = arith.constant 1 : i32
    %5 = arith.cmpi eq, %arg0, %c1_i32 : i32
    %6 = arith.extui %5 : i1 to i32
    %c0_i32_1 = arith.constant 0 : i32
    %7 = arith.cmpi ne, %6, %c0_i32_1 : i32
    scf.if %7 {
      %8 = arith.index_cast %1 : i32 to index
      %c0 = arith.constant 0 : index
      %9 = vector.load %arg9[%8, %c0] : memref<8x32xf32, #tpu.memory_space<vmem>>, vector<8x32xf32>
      %c0_2 = arith.constant 0 : index
      %c0_3 = arith.constant 0 : index
      %10 = vector.load %arg12[%c0_2, %c0_3] : memref<1x32xf32, #tpu.memory_space<vmem>>, vector<1x32xf32>
      %11 = vector.broadcast %10 : vector<1x32xf32> to vector<8x32xf32>
      %12 = arith.mulf %9, %11 : vector<8x32xf32>
      %c0_4 = arith.constant 0 : index
      %c0_5 = arith.constant 0 : index
      %13 = vector.load %arg13[%c0_4, %c0_5] : memref<1x32xf32, #tpu.memory_space<vmem>>, vector<1x32xf32>
      %14 = vector.broadcast %13 : vector<1x32xf32> to vector<8x32xf32>
      %15 = arith.addf %12, %14 : vector<8x32xf32>
      %cst = arith.constant 0.000000e+00 : f32
      %16 = vector.broadcast %cst : f32 to vector<8x32xf32>
      %17 = arith.maximumf %15, %16 : vector<8x32xf32>
      %18 = arith.truncf %17 : vector<8x32xf32> to vector<8x32xbf16>
      %c0_6 = arith.constant 0 : index
      %c0_7 = arith.constant 0 : index
      %19 = vector.load %arg6[%c0_6, %c0_7] : memref<32x8xbf16, #tpu.memory_space<vmem>>, vector<32x8xbf16>
      %cst_8 = arith.constant dense<0.000000e+00> : vector<8x8xf32>
      %20 = tpu.matmul %18, %19, %cst_8 {dimension_numbers = #tpu.dot_dimension_numbers<[1], [0], [0], [1], [0, 0, 1, 1], [], []>} : vector<8x32xbf16>, vector<32x8xbf16>, vector<8x8xf32> -> vector<8x8xf32>
      %c0_9 = arith.constant 0 : index
      %c0_10 = arith.constant 0 : index
      %21 = vector.load %arg7[%c0_9, %c0_10] : memref<1x8xf32, #tpu.memory_space<vmem>>, vector<1x8xf32>
      %22 = vector.broadcast %21 : vector<1x8xf32> to vector<8x8xf32>
      %23 = arith.addf %20, %22 : vector<8x8xf32>
      %24 = arith.negf %23 : vector<8x8xf32>
      %25 = math.exp %24 : vector<8x8xf32>
      %cst_11 = arith.constant 1.000000e+00 : f32
      %26 = vector.broadcast %cst_11 : f32 to vector<8x8xf32>
      %27 = arith.addf %26, %25 : vector<8x8xf32>
      %28 = arith.divf %26, %27 : vector<8x8xf32>
      %c0_12 = arith.constant 0 : index
      %c0_13 = arith.constant 0 : index
      %29 = vector.load %arg8[%c0_12, %c0_13] : memref<8x8xf32, #tpu.memory_space<vmem>>, vector<8x8xf32>
      tpu.vector_store %arg8[%c0_12, %c0_13], %28 {strides = array<i32>} : memref<8x8xf32, #tpu.memory_space<vmem>>, vector<8x8xf32>,
    } else {
    }
    return
  }
  func.func @transform_0(%arg0: i32, %arg1: i32) -> (i32, i32) {
    %c1_i32 = arith.constant 1 : i32
    %0 = arith.subi %c1_i32, %arg0 : i32
    %1 = arith.muli %arg1, %0 : i32
    %c0_i32 = arith.constant 0 : i32
    %c0_i32_0 = arith.constant 0 : i32
    return %1, %c0_i32 : i32, i32
  }
  func.func @transform_1(%arg0: i32, %arg1: i32) -> (i32, i32) {
    %c0_i32 = arith.constant 0 : i32
    %c0_i32_0 = arith.constant 0 : i32
    %c0_i32_1 = arith.constant 0 : i32
    return %c0_i32, %c0_i32_0 : i32, i32
  }
  func.func @transform_2(%arg0: i32, %arg1: i32) -> (i32, i32) {
    %c0_i32 = arith.constant 0 : i32
    %c0_i32_0 = arith.constant 0 : i32
    %c0_i32_1 = arith.constant 0 : i32
    return %c0_i32, %c0_i32_0 : i32, i32
  }
  func.func @transform_3(%arg0: i32, %arg1: i32) -> (i32, i32) {
    %c0_i32 = arith.constant 0 : i32
    %c0_i32_0 = arith.constant 0 : i32
    %c0_i32_1 = arith.constant 0 : i32
    return %c0_i32, %c0_i32_0 : i32, i32
  }
  func.func @transform_4(%arg0: i32, %arg1: i32) -> (i32, i32) {
    %c0_i32 = arith.constant 0 : i32
    %c0_i32_0 = arith.constant 0 : i32
    %c0_i32_1 = arith.constant 0 : i32
    return %c0_i32, %c0_i32_0 : i32, i32
  }
  func.func @transform_5(%arg0: i32, %arg1: i32) -> (i32, i32) {
    %c0_i32 = arith.constant 0 : i32
    %c0_i32_0 = arith.constant 0 : i32
    %c0_i32_1 = arith.constant 0 : i32
    return %c0_i32, %c0_i32_0 : i32, i32
  }
  func.func @transform_6(%arg0: i32, %arg1: i32) -> (i32, i32) {
    %0 = arith.muli %arg1, %arg0 : i32
    %c0_i32 = arith.constant 0 : i32
    %c0_i32_0 = arith.constant 0 : i32
    return %0, %c0_i32 : i32, i32
  }
}

</mosaic_0001>

<llo_original>
// kernel: projectile_forward.1
$region0: #{projectile_forward.1}
  #allocation0 [shape = 'u32[]', space=smem, size = 0x4, offset = 0x4, fixed_abs, tag = 'smem constant byte address 0x4 - core index']
  #allocation1 [shape = 'u32[144,128]{1,0:T(1,128)}', space=vmem, size = 0x12000, scoped, tag = 'internal scratch']
  #allocation2 [shape = 'f32[8,32]{1,0:T(8,128)}', space=vmem, size = 0x1000, scoped, tag = 'scratch operand']
  #allocation3 [shape = 'f32[1,32]{1,0:T(1,128)}', space=vmem, size = 0x200, scoped, tag = 'scratch operand']
  #allocation4 [shape = 'f32[1,32]{1,0:T(1,128)}', space=vmem, size = 0x200, scoped, tag = 'scratch operand']
  #allocation5 [shape = 'f32[1,32]{1,0:T(1,128)}', space=vmem, size = 0x200, scoped, tag = 'scratch operand']
  #allocation6 [shape = 'f32[1,32]{1,0:T(1,128)}', space=vmem, size = 0x200, scoped, tag = 'scratch operand']
  %s0 = inlined_call_operand.vmem [shape: f32[8,16], index: 0, kind: input, shape index: {}]
  %s1 = inlined_call_operand.vmem [shape: bf16[16,32], index: 1, kind: input, shape index: {}]
  %s2 = inlined_call_operand.vmem [shape: f32[1,32], index: 2, kind: input, shape index: {}]
  %s3 = inlined_call_operand.vmem [shape: f32[1,32], index: 3, kind: input, shape index: {}]
  %s4 = inlined_call_operand.vmem [shape: bf16[32,8], index: 4, kind: input, shape index: {}]
  %s5 = inlined_call_operand.vmem [shape: f32[1,8], index: 5, kind: input, shape index: {}]
  %s6 = inlined_call_operand.vmem [shape: f32[8,8], index: 6, kind: output, shape index: {}]
  %s7 = sld [smem:[#allocation0]]
  $region73: #{projectile_forward.1} parent=0
    _
  %s9 = ssub.s32 1, %s7
  %s10 = scalar_select 0, %s9, %s7
  loop: start=0, step=1, limit=4
  $region2: #{projectile_forward.1} parent=0 // loop_pre_header
    _
  $region3: #{projectile_forward.1} parent=0 // loop_header
    %s12 = sphi 0, %s16
    %p13 = scmp.ge.s32.totalorder %s12, 4
    %s19 = sphi 0, %s31
    %s20 = sphi 0, %s27
    %s21 = sphi 0, %s19
    %s22 = sphi 0, %s20
    %s23 = sphi 0, %s21
    %s24 = sphi 0, %s22
    %s38 = sphi 0, %s40
    %s41 = sphi 0, %s38
    %s42 = sphi 0, %s41
    %s58 = sphi 0, %s42
    %s62 = sphi 0, %s62
    %s64 = sphi 0, %s62
    %s65 = sphi 0, %s64
    %s79 = sphi 0, %s65
    %s83 = sphi 0, %s83
    %s85 = sphi 0, %s83
    %s86 = sphi 0, %s85
    %s100 = sphi 0, %s86
    %s104 = sphi 0, %s104
    %s106 = sphi 0, %s104
    %s107 = sphi 0, %s106
    %s121 = sphi 0, %s107
    %s125 = sphi 0, %s125
    %s127 = sphi 0, %s125
    %s128 = sphi 0, %s127
    %s142 = sphi 0, %s128
    %s146 = sphi 0, %s146
    %s148 = sphi 0, %s146
    %s149 = sphi 0, %s148
    %s163 = sphi 0, %s149
    %s171 = sphi 0, %s173
    %s174 = sphi 0, %s171
    %s175 = sphi 0, %s174
    %s191 = sphi 0, %s175
  $region4: #{projectile_forward.1} parent=0 // loop_header_branch
    %15 = sbr.rel (%p13) target = $region8
  $region5: #{projectile_forward.1} parent=0 // loop_body
    %s17 = ssub.s32 %s12, 1
    %s18 = ssub.s32 %s12, 2
    %s25 = sadd.s32 1, %s20
    %p26 = scmp.ge.s32.totalorder %s25, 1
    %s27 = scalar_select %p26, 0, %s25
    %s28 = sadd.s32 1, %s19
    %s29 = scalar_select %p26, %s28, %s19
    %p30 = scmp.ge.s32.totalorder %s29, 2
    %s31 = scalar_select %p30, 0, %s29
    %s32 = ssub.s32 1, %s19
    %s33 = smul.u32 %s20, %s32
    %s34 = ssub.s32 1, %s31
    %s35 = smul.u32 %s27, %s34
    %s36 = ssub.s32 %s33, %s35
    %p37 = scmp.eq.s32.totalorder %s36, 0
    %s39 = sadd.s32 %s38, 1
    %s40 = scalar_select %p37, %s38, %s39
    %p43 = pneg %p37
    %p44 = scmp.eq.s32.totalorder %s12, 1
    %p45 = por %p43, %p44
    %p46 = scmp.ne.s32.totalorder %s38, %s41
    %p47 = scmp.eq.s32.totalorder %s12, 0
    %p48 = por %p46, %p47
    %p49 = scmp.ne.s32.totalorder %s38, %s41
    %p50 = scmp.eq.s32.totalorder %s17, 1
    %p51 = por %p49, %p50
    %p52 = scmp.ne.s32.totalorder %s41, %s42
    %p53 = scmp.eq.s32.totalorder %s17, 0
    %p54 = por %p52, %p53
    %p55 = scmp.ne.s32.totalorder %s41, %s42
    %p56 = scmp.eq.s32.totalorder %s18, 1
    %p57 = por %p55, %p56
    %p59 = scmp.ne.s32.totalorder %s42, %s58
    %p60 = scmp.eq.s32.totalorder %s18, 0
    %p61 = por %p59, %p60
    %s63 = sadd.s32 %s62, 1
    %p66 = scmp.eq.s32.totalorder %s12, 1
    %p67 = scmp.ne.s32.totalorder %s62, %s64
    %p68 = scmp.eq.s32.totalorder %s12, 0
    %p69 = por %p67, %p68
    %p70 = scmp.ne.s32.totalorder %s62, %s64
    %p71 = scmp.eq.s32.totalorder %s17, 1
    %p72 = por %p70, %p71
    %p73 = scmp.ne.s32.totalorder %s64, %s65
    %p74 = scmp.eq.s32.totalorder %s17, 0
    %p75 = por %p73, %p74
    %p76 = scmp.ne.s32.totalorder %s64, %s65
    %p77 = scmp.eq.s32.totalorder %s18, 1
    %p78 = por %p76, %p77
    %p80 = scmp.ne.s32.totalorder %s65, %s79
    %p81 = scmp.eq.s32.totalorder %s18, 0
    %p82 = por %p80, %p81
    %s84 = sadd.s32 %s83, 1
    %p87 = scmp.eq.s32.totalorder %s12, 1
    %p88 = scmp.ne.s32.totalorder %s83, %s85
    %p89 = scmp.eq.s32.totalorder %s12, 0
    %p90 = por %p88, %p89
    %p91 = scmp.ne.s32.totalorder %s83, %s85
    %p92 = scmp.eq.s32.totalorder %s17, 1
    %p93 = por %p91, %p92
    %p94 = scmp.ne.s32.totalorder %s85, %s86
    %p95 = scmp.eq.s32.totalorder %s17, 0
    %p96 = por %p94, %p95
    %p97 = scmp.ne.s32.totalorder %s85, %s86
    %p98 = scmp.eq.s32.totalorder %s18, 1
    %p99 = por %p97, %p98
    %p101 = scmp.ne.s32.totalorder %s86, %s100
    %p102 = scmp.eq.s32.totalorder %s18, 0
    %p103 = por %p101, %p102
    %s105 = sadd.s32 %s104, 1
    %p108 = scmp.eq.s32.totalorder %s12, 1
    %p109 = scmp.ne.s32.totalorder %s104, %s106
    %p110 = scmp.eq.s32.totalorder %s12, 0
    %p111 = por %p109, %p110
    %p112 = scmp.ne.s32.totalorder %s104, %s106
    %p113 = scmp.eq.s32.totalorder %s17, 1
    %p114 = por %p112, %p113
    %p115 = scmp.ne.s32.totalorder %s106, %s107
    %p116 = scmp.eq.s32.totalorder %s17, 0
    %p117 = por %p115, %p116
    %p118 = scmp.ne.s32.totalorder %s106, %s107
    %p119 = scmp.eq.s32.totalorder %s18, 1
    %p120 = por %p118, %p119
    %p122 = scmp.ne.s32.totalorder %s107, %s121
    %p123 = scmp.eq.s32.totalorder %s18, 0
    %p124 = por %p122, %p123
    %s126 = sadd.s32 %s125, 1
    %p129 = scmp.eq.s32.totalorder %s12, 1
    %p130 = scmp.ne.s32.totalorder %s125, %s127
    %p131 = scmp.eq.s32.totalorder %s12, 0
    %p132 = por %p130, %p131
    %p133 = scmp.ne.s32.totalorder %s125, %s127
    %p134 = scmp.eq.s32.totalorder %s17, 1
    %p135 = por %p133, %p134
    %p136 = scmp.ne.s32.totalorder %s127, %s128
    %p137 = scmp.eq.s32.totalorder %s17, 0
    %p138 = por %p136, %p137
    %p139 = scmp.ne.s32.totalorder %s127, %s128
    %p140 = scmp.eq.s32.totalorder %s18, 1
    %p141 = por %p139, %p140
    %p143 = scmp.ne.s32.totalorder %s128, %s142
    %p144 = scmp.eq.s32.totalorder %s18, 0
    %p145 = por %p143, %p144
    %s147 = sadd.s32 %s146, 1
    %p150 = scmp.eq.s32.totalorder %s12, 1
    %p151 = scmp.ne.s32.totalorder %s146, %s148
    %p152 = scmp.eq.s32.totalorder %s12, 0
    %p153 = por %p151, %p152
    %p154 = scmp.ne.s32.totalorder %s146, %s148
    %p155 = scmp.eq.s32.totalorder %s17, 1
    %p156 = por %p154, %p155
    %p157 = scmp.ne.s32.totalorder %s148, %s149
    %p158 = scmp.eq.s32.totalorder %s17, 0
    %p159 = por %p157, %p158
    %p160 = scmp.ne.s32.totalorder %s148, %s149
    %p161 = scmp.eq.s32.totalorder %s18, 1
    %p162 = por %p160, %p161
    %p164 = scmp.ne.s32.totalorder %s149, %s163
    %p165 = scmp.eq.s32.totalorder %s18, 0
    %p166 = por %p164, %p165
    %s167 = smul.u32 %s20, %s19
    %s168 = smul.u32 %s27, %s31
    %s169 = ssub.s32 %s167, %s168
    %p170 = scmp.eq.s32.totalorder %s169, 0
    %s172 = sadd.s32 %s171, 1
    %s173 = scalar_select %p170, %s171, %s172
    %p176 = pneg %p170
    %p177 = scmp.eq.s32.totalorder %s12, 1
    %p178 = por %p176, %p177
    %p179 = scmp.ne.s32.totalorder %s171, %s174
    %p180 = scmp.eq.s32.totalorder %s12, 0
    %p181 = por %p179, %p180
    %p182 = scmp.ne.s32.totalorder %s171, %s174
    %p183 = scmp.eq.s32.totalorder %s17, 1
    %p184 = por %p182, %p183
    %p185 = scmp.ne.s32.totalorder %s174, %s175
    %p186 = scmp.eq.s32.totalorder %s17, 0
    %p187 = por %p185, %p186
    %p188 = scmp.ne.s32.totalorder %s174, %s175
    %p189 = scmp.eq.s32.totalorder %s18, 1
    %p190 = por %p188, %p189
    %p192 = scmp.ne.s32.totalorder %s175, %s191
    %p193 = scmp.eq.s32.totalorder %s18, 0
    %p194 = por %p192, %p193
    %p195 = scmp.le.s32.totalorder 1, %s12
    %p196 = scmp.lt.s32.totalorder %s12, 3
    %p197 = pnand %p195, %p196
    %p198 = pneg %p197
    // Predicated region
    $region9: #{projectile_forward.1} parent=5 // pred_check
      _
    $region10: #{projectile_forward.1} parent=5 // pred_check_branch
      %200 = sbr.rel (%p197) target = $region12
    $region11: #{projectile_forward.1} parent=5 // pred_region
      %s201 = ssub.s32 %s12, 1
      // Predicated region
      $region13: #{projectile_forward.1} parent=11 // pred_check
        %p202 = pneg %p75
      $region14: #{projectile_forward.1} parent=11 // pred_check_branch
        %204 = sbr.rel (%p202) target = $region16
      $region15: #{projectile_forward.1} parent=11 // pred_region
        _
      $region16: #{projectile_forward.1} parent=11 // pred_fallthru
        _
      // Predicated region
      $region17: #{projectile_forward.1} parent=11 // pred_check
        %p205 = pneg %p96
      $region18: #{projectile_forward.1} parent=11 // pred_check_branch
        %207 = sbr.rel (%p205) target = $region20
      $region19: #{projectile_forward.1} parent=11 // pred_region
        _
      $region20: #{projectile_forward.1} parent=11 // pred_fallthru
        _
      // Predicated region
      $region21: #{projectile_forward.1} parent=11 // pred_check
        %p208 = pneg %p117
      $region22: #{projectile_forward.1} parent=11 // pred_check_branch
        %210 = sbr.rel (%p208) target = $region24
      $region23: #{projectile_forward.1} parent=11 // pred_region
        _
      $region24: #{projectile_forward.1} parent=11 // pred_fallthru
        _
      // Predicated region
      $region25: #{projectile_forward.1} parent=11 // pred_check
        %p211 = pneg %p138
      $region26: #{projectile_forward.1} parent=11 // pred_check_branch
        %213 = sbr.rel (%p211) target = $region28
      $region27: #{projectile_forward.1} parent=11 // pred_region
        _
      $region28: #{projectile_forward.1} parent=11 // pred_fallthru
        _
      // Predicated region
      $region29: #{projectile_forward.1} parent=11 // pred_check
        %p214 = pneg %p159
      $region30: #{projectile_forward.1} parent=11 // pred_check_branch
        %216 = sbr.rel (%p214) target = $region32
      $region31: #{projectile_forward.1} parent=11 // pred_region
        _
      $region32: #{projectile_forward.1} parent=11 // pred_fallthru
        _
    $region12: #{projectile_forward.1} parent=5 // pred_fallthru
      _
    %p217 = scmp.lt.s32.totalorder %s12, 2
    // Predicated region
    $region33: #{projectile_forward.1} parent=5 // pred_check
      %p218 = pneg %p217
    $region34: #{projectile_forward.1} parent=5 // pred_check_branch
      %220 = sbr.rel (%p218) target = $region36
    $region35: #{projectile_forward.1} parent=5 // pred_region
      // Predicated region
      $region37: #{projectile_forward.1} parent=35 // pred_check
        %p221 = pneg %p48
      $region38: #{projectile_forward.1} parent=35 // pred_check_branch
        %223 = sbr.rel (%p221) target = $region40
      $region39: #{projectile_forward.1} parent=35 // pred_region
        %s224 = ssub.s32 1, %s19
        %s225 = smul.u32 %s20, %s224
        %p226 = scmp.lt.s32.totalorder %s225, 0
        %s227 = scalar_select %p226, %s225, 0
        %s228 = smul.addr %s227, 8
        %s229 = scalar_lea.vmem %s0, %s228
        %s230 = ssub.s32 1, %s19
        %s231 = smul.u32 %s20, %s230
      $region40: #{projectile_forward.1} parent=35 // pred_fallthru
        _
    $region36: #{projectile_forward.1} parent=5 // pred_fallthru
      _
    %p232 = scmp.le.s32.totalorder 1, %s12
    %p233 = scmp.lt.s32.totalorder %s12, 3
    %p234 = pnand %p232, %p233
    %p235 = pneg %p234
    // Predicated region
    $region41: #{projectile_forward.1} parent=5 // pred_check
      _
    $region42: #{projectile_forward.1} parent=5 // pred_check_branch
      %237 = sbr.rel (%p234) target = $region44
    $region43: #{projectile_forward.1} parent=5 // pred_region
      %s238 = ssub.s32 %s12, 1
      %s239 = ssub.s32 1, %s21
      %s240 = smul.u32 %s22, %s239
      %p241 = scmp.lt.s32.totalorder %s240, 0
      %s242 = scalar_select %p241, %s240, 0
      %s243 = smul.addr %s242, 8
      %s244 = scalar_lea.vmem %s0, %s243
      %p245 = pneg %p54
      %p246 = pneg %p51
      %p247 = pneg %p75
      %p248 = pneg %p72
      %p249 = pneg %p96
      %p250 = pneg %p93
      %p251 = pneg %p117
      %p252 = pneg %p114
      %p253 = pneg %p138
      %p254 = pneg %p135
      %p255 = pneg %p159
      %p256 = pneg %p156
      %p257 = pneg %p187
      %p258 = pneg %p184
      %s259 = smul.u32 %s22, %s21
      %p260 = scmp.lt.s32.totalorder %s259, 0
      %s261 = scalar_select %p260, %s259, 0
      %s262 = smul.addr %s261, 8
      %s263 = scalar_lea.vmem %s6, %s262
      %s264 = ssub.s32 1, %s21
      %s265 = smul.u32 %s22, %s264
      %p266 = scmp.lt.s32.totalorder %s265, 0
      %s267 = scalar_select %p266, %s265, 0
      %s268 = smul.addr %s267, 8
      %s269 = scalar_lea.vmem %s0, %s268
      %s270 = ssub.s32 1, %s21
      %s271 = smul.u32 %s22, %s270
      %s272 = smul.u32 %s22, %s21
      %p273 = scmp.lt.s32.totalorder %s272, 0
      %s274 = scalar_select %p273, %s272, 0
      %s275 = smul.addr %s274, 8
      %s276 = scalar_lea.vmem %s6, %s275
      %s277 = smul.u32 %s22, %s21
      %s279 = smul.u32 %s22, 8
      %p280 = scmp.eq.s32.totalorder %s21, 0
      // Predicated region
      $region45: #{projectile_forward.1} parent=43 // pred_check
        %p281 = pneg %p280
      $region46: #{projectile_forward.1} parent=43 // pred_check_branch
        %283 = sbr.rel (%p281) target = $region48
      $region47: #{projectile_forward.1} parent=43 // pred_region
        %p284 = scmp.eq.s32.totalorder %s22, 0
        // Predicated region
        $region49: #{projectile_forward.1} parent=47 // pred_check
          %p285 = pneg %p284
        $region50: #{projectile_forward.1} parent=47 // pred_check_branch
          %287 = sbr.rel (%p285) target = $region52
        $region51: #{projectile_forward.1} parent=47 // pred_region
          %vm288 = vcmask 253952
          %289 = vst.msk [vmem:[#allocation3] sm:$0x1] %vm288, 0.0
          %290 = vst.msk [vmem:[#allocation4] sm:$0x1] %vm288, 0.0
        $region52: #{projectile_forward.1} parent=47 // pred_fallthru
          _
        %v291 = vld [vmem:[%s269] sm:$0xff]
        %v292 = vpack.c.bf16 %v291, %v291
        %v293 = vld [vmem:[%s1] sm:$0xf]
        %v294 = vld [vmem:[%s1 + $0x4] sm:$0xf]
        %v297 = vunpack.c.l.b16 %v293
        %v298 = vunpack.c.l.b16 %v294
        %v299 = vpack.c.b16 %v298, %v297
        %vm301 = vcmask 130048
        %v303 = vsel %vm301, %v292, 0
        %305 = vmatprep.subr.bf16.mxu0 0
        %306 = vmatpush1.bf16.msra.mxu0 0
        %307 = vmatprep.subr.bf16.mxu0 0
        %308 = vmatpush1.bf16.msra.mxu0 0
        %309 = vmatprep.subr.bf16.mxu0 0
        %310 = vmatpush1.bf16.msra.mxu0 0
        %311 = vmatprep.subr.bf16.mxu0 0
        %312 = vmatpush1.bf16.msra.mxu0 0
        %313 = vmatprep.subr.bf16.mxu0 0
        %314 = vmatpush1.bf16.msra.mxu0 0
        %315 = vmatprep.subr.bf16.mxu0 0
        %316 = vmatpush1.bf16.msra.mxu0 0
        %317 = vmatprep.subr.bf16.mxu0 0
        %318 = vmatpush1.bf16.msra.mxu0 0
        %319 = vmatprep.subr.bf16.mxu0 0
        %320 = vmatpush1.bf16.msra.mxu0 %v299
        %321 = vmatprep.subr.bf16.mxu0 0
        %322 = vmatpush2.bf16.msra.mxu0 0
        %323 = vmatprep.subr.bf16.mxu0 0
        %324 = vmatpush2.bf16.msra.mxu0 0
        %325 = vmatprep.subr.bf16.mxu0 0
        %326 = vmatpush2.bf16.msra.mxu0 0
        %327 = vmatprep.subr.bf16.mxu0 0
        %328 = vmatpush2.bf16.msra.mxu0 0
        %329 = vmatprep.subr.bf16.mxu0 0
        %330 = vmatpush2.bf16.msra.mxu0 0
        %331 = vmatprep.subr.bf16.mxu0 0
        %332 = vmatpush2.bf16.msra.mxu0 0
        %333 = vmatprep.subr.bf16.mxu0 0
        %334 = vmatpush2.bf16.msra.mxu0 0
        %335 = vmatprep.subr.bf16.mxu0 0
        %336 = vmatpush2.bf16.msra.mxu0 0
        %337 = vmatprep.mubr.bf16.mxu0 0
        %338 = vmatmul.mubr.bf16.gmra.mxu0 %v303
        %v339 = vpop.f32.mrf.mxu0
        %v340 = vadd.f32 0.0, %v339
        %v341 = vpop.f32.mrf.mxu0
        %v342 = vpop.f32.mrf.mxu0
        %v343 = vpop.f32.mrf.mxu0
        %344 = vdwg.mxu0
        %s345 = scalar_lea.vmem [#allocation2], %s279
        %vm346 = vcmask 261120
        %347 = vst.msk [vmem:[%s345] sm:$0xff] %vm346, %v340
        %v348 = vld [vmem:[#allocation3] sm:$0x1]
        %vm349 = vcmask 64512
        %v351 = vsel %vm349, 1.0, 0
        %353 = vmatprep.subr.mxu0 0.0
        %354 = vmatpush1.msra.mxu0 0.0
        %355 = vmatprep.subr.mxu0 0.0
        %356 = vmatpush1.msra.mxu0 0.0
        %357 = vmatprep.subr.mxu0 0.0
        %358 = vmatpush1.msra.mxu0 0.0
        %359 = vmatprep.subr.mxu0 0.0
        %360 = vmatpush1.msra.mxu0 0.0
        %361 = vmatprep.subr.mxu0 0.0
        %362 = vmatpush1.msra.mxu0 0.0
        %363 = vmatprep.subr.mxu0 0.0
        %364 = vmatpush1.msra.mxu0 0.0
        %365 = vmatprep.subr.mxu0 0.0
        %366 = vmatpush1.msra.mxu0 0.0
        %367 = vmatprep.subr.mxu0 0.0
        %368 = vmatpush1.msra.mxu0 0.0
        %369 = vmatprep.subr.mxu0 0.0
        %370 = vmatpush1.msra.mxu0 0.0
        %371 = vmatprep.subr.mxu0 0.0
        %372 = vmatpush1.msra.mxu0 0.0
        %373 = vmatprep.subr.mxu0 0.0
        %374 = vmatpush1.msra.mxu0 0.0
        %375 = vmatprep.subr.mxu0 0.0
        %376 = vmatpush1.msra.mxu0 0.0
        %377 = vmatprep.subr.mxu0 0.0
        %378 = vmatpush1.msra.mxu0 0.0
        %379 = vmatprep.subr.mxu0 0.0
        %380 = vmatpush1.msra.mxu0 0.0
        %381 = vmatprep.subr.mxu0 0.0
        %382 = vmatpush1.msra.mxu0 0.0
        %383 = vmatprep.subr.mxu0 0.0
        %v384 = vand.u32 %v340, 4294901760
        %385 = vmatpush1.msra.mxu0 %v384
        %386 = vmatprep.subr.mxu0 0.0
        %387 = vmatpush2.msra.mxu0 0.0
        %388 = vmatprep.subr.mxu0 0.0
        %389 = vmatpush2.msra.mxu0 0.0
        %390 = vmatprep.subr.mxu0 0.0
        %391 = vmatpush2.msra.mxu0 0.0
        %392 = vmatprep.subr.mxu0 0.0
        %393 = vmatpush2.msra.mxu0 0.0
        %394 = vmatprep.subr.mxu0 0.0
        %395 = vmatpush2.msra.mxu0 0.0
        %396 = vmatprep.subr.mxu0 0.0
        %397 = vmatpush2.msra.mxu0 0.0
        %398 = vmatprep.subr.mxu0 0.0
        %399 = vmatpush2.msra.mxu0 0.0
        %400 = vmatprep.subr.mxu0 0.0
        %401 = vmatpush2.msra.mxu0 0.0
        %402 = vmatprep.subr.mxu0 0.0
        %403 = vmatpush2.msra.mxu0 0.0
        %404 = vmatprep.subr.mxu0 0.0
        %405 = vmatpush2.msra.mxu0 0.0
        %406 = vmatprep.subr.mxu0 0.0
        %407 = vmatpush2.msra.mxu0 0.0
        %408 = vmatprep.subr.mxu0 0.0
        %409 = vmatpush2.msra.mxu0 0.0
        %410 = vmatprep.subr.mxu0 0.0
        %411 = vmatpush2.msra.mxu0 0.0
        %412 = vmatprep.subr.mxu0 0.0
        %413 = vmatpush2.msra.mxu0 0.0
        %414 = vmatprep.subr.mxu0 0.0
        %415 = vmatpush2.msra.mxu0 0.0
        %416 = vmatprep.subr.mxu0 0.0
        %417 = vmatpush2.msra.mxu0 0.0
        %418 = vmatprep.mubr.f32.mxu0 0.0
        %v419 = vand.u32 %v351, 4294901760
        %v420 = vsub.f32 %v351, %v419
        %v421 = vand.u32 %v420, 4294901760
        %v422 = vsub.f32 %v420, %v421
        %v423 = vand.u32 %v422, 4294901760
        %424 = vmatmul.mubr.f32.gmra.mxu0 %v423
        %v425 = vpop.f32.mrf.mxu0
        %v426 = vadd.f32 0.0, %v425
        %v427 = vpop.f32.mrf.mxu0
        %428 = vdwg.mxu0
        %429 = vmatprep.subr.mxu0 0.0
        %430 = vmatpush1.msra.mxu0 0.0
        %431 = vmatprep.subr.mxu0 0.0
        %432 = vmatpush1.msra.mxu0 0.0
        %433 = vmatprep.subr.mxu0 0.0
        %434 = vmatpush1.msra.mxu0 0.0
        %435 = vmatprep.subr.mxu0 0.0
        %436 = vmatpush1.msra.mxu0 0.0
        %437 = vmatprep.subr.mxu0 0.0
        %438 = vmatpush1.msra.mxu0 0.0
        %439 = vmatprep.subr.mxu0 0.0
        %440 = vmatpush1.msra.mxu0 0.0
        %441 = vmatprep.subr.mxu0 0.0
        %442 = vmatpush1.msra.mxu0 0.0
        %443 = vmatprep.subr.mxu0 0.0
        %444 = vmatpush1.msra.mxu0 0.0
        %445 = vmatprep.subr.mxu0 0.0
        %446 = vmatpush1.msra.mxu0 0.0
        %447 = vmatprep.subr.mxu0 0.0
        %448 = vmatpush1.msra.mxu0 0.0
        %449 = vmatprep.subr.mxu0 0.0
        %450 = vmatpush1.msra.mxu0 0.0
        %451 = vmatprep.subr.mxu0 0.0
        %452 = vmatpush1.msra.mxu0 0.0
        %453 = vmatprep.subr.mxu0 0.0
        %454 = vmatpush1.msra.mxu0 0.0
        %455 = vmatprep.subr.mxu0 0.0
        %456 = vmatpush1.msra.mxu0 0.0
        %457 = vmatprep.subr.mxu0 0.0
        %458 = vmatpush1.msra.mxu0 0.0
        %459 = vmatprep.subr.mxu0 0.0
        %v460 = vand.u32 %v340, 4294901760
        %v461 = vsub.f32 %v340, %v460
        %v462 = vand.u32 %v461, 4294901760
        %v463 = vsub.f32 %v461, %v462
        %v464 = vand.u32 %v463, 4294901760
        %465 = vmatpush1.msra.mxu0 %v464
        %466 = vmatprep.subr.mxu0 0.0
        %467 = vmatpush2.msra.mxu0 0.0
        %468 = vmatprep.subr.mxu0 0.0
        %469 = vmatpush2.msra.mxu0 0.0
        %470 = vmatprep.subr.mxu0 0.0
        %471 = vmatpush2.msra.mxu0 0.0
        %472 = vmatprep.subr.mxu0 0.0
        %473 = vmatpush2.msra.mxu0 0.0
        %474 = vmatprep.subr.mxu0 0.0
        %475 = vmatpush2.msra.mxu0 0.0
        %476 = vmatprep.subr.mxu0 0.0
        %477 = vmatpush2.msra.mxu0 0.0
        %478 = vmatprep.subr.mxu0 0.0
        %479 = vmatpush2.msra.mxu0 0.0
        %480 = vmatprep.subr.mxu0 0.0
        %481 = vmatpush2.msra.mxu0 0.0
        %482 = vmatprep.subr.mxu0 0.0
        %483 = vmatpush2.msra.mxu0 0.0
        %484 = vmatprep.subr.mxu0 0.0
        %485 = vmatpush2.msra.mxu0 0.0
        %486 = vmatprep.subr.mxu0 0.0
        %487 = vmatpush2.msra.mxu0 0.0
        %488 = vmatprep.subr.mxu0 0.0
        %489 = vmatpush2.msra.mxu0 0.0
        %490 = vmatprep.subr.mxu0 0.0
        %491 = vmatpush2.msra.mxu0 0.0
        %492 = vmatprep.subr.mxu0 0.0
        %493 = vmatpush2.msra.mxu0 0.0
        %494 = vmatprep.subr.mxu0 0.0
        %495 = vmatpush2.msra.mxu0 0.0
        %496 = vmatprep.subr.mxu0 0.0
        %497 = vmatpush2.msra.mxu0 0.0
        %498 = vmatprep.mubr.f32.mxu0 0.0
        %v499 = vand.u32 %v351, 4294901760
        %500 = vmatmul.mubr.f32.gmra.mxu0 %v499
        %v501 = vpop.f32.mrf.mxu0
        %v502 = vadd.f32 %v426, %v501
        %v503 = vpop.f32.mrf.mxu0
        %504 = vdwg.mxu0
        %505 = vmatprep.subr.mxu0 0.0
        %506 = vmatpush1.msra.mxu0 0.0
        %507 = vmatprep.subr.mxu0 0.0
        %508 = vmatpush1.msra.mxu0 0.0
        %509 = vmatprep.subr.mxu0 0.0
        %510 = vmatpush1.msra.mxu0 0.0
        %511 = vmatprep.subr.mxu0 0.0
        %512 = vmatpush1.msra.mxu0 0.0
        %513 = vmatprep.subr.mxu0 0.0
        %514 = vmatpush1.msra.mxu0 0.0
        %515 = vmatprep.subr.mxu0 0.0
        %516 = vmatpush1.msra.mxu0 0.0
        %517 = vmatprep.subr.mxu0 0.0
        %518 = vmatpush1.msra.mxu0 0.0
        %519 = vmatprep.subr.mxu0 0.0
        %520 = vmatpush1.msra.mxu0 0.0
        %521 = vmatprep.subr.mxu0 0.0
        %522 = vmatpush1.msra.mxu0 0.0
        %523 = vmatprep.subr.mxu0 0.0
        %524 = vmatpush1.msra.mxu0 0.0
        %525 = vmatprep.subr.mxu0 0.0
        %526 = vmatpush1.msra.mxu0 0.0
        %527 = vmatprep.subr.mxu0 0.0
        %528 = vmatpush1.msra.mxu0 0.0
        %529 = vmatprep.subr.mxu0 0.0
        %530 = vmatpush1.msra.mxu0 0.0
        %531 = vmatprep.subr.mxu0 0.0
        %532 = vmatpush1.msra.mxu0 0.0
        %533 = vmatprep.subr.mxu0 0.0
        %534 = vmatpush1.msra.mxu0 0.0
        %535 = vmatprep.subr.mxu0 0.0
        %v536 = vand.u32 %v340, 4294901760
        %v537 = vsub.f32 %v340, %v536
        %538 = vmatpush1.msra.mxu0 %v537
        %539 = vmatprep.subr.mxu0 0.0
        %540 = vmatpush2.msra.mxu0 0.0
        %541 = vmatprep.subr.mxu0 0.0
        %542 = vmatpush2.msra.mxu0 0.0
        %543 = vmatprep.subr.mxu0 0.0
        %544 = vmatpush2.msra.mxu0 0.0
        %545 = vmatprep.subr.mxu0 0.0
        %546 = vmatpush2.msra.mxu0 0.0
        %547 = vmatprep.subr.mxu0 0.0
        %548 = vmatpush2.msra.mxu0 0.0
        %549 = vmatprep.subr.mxu0 0.0
        %550 = vmatpush2.msra.mxu0 0.0
        %551 = vmatprep.subr.mxu0 0.0
        %552 = vmatpush2.msra.mxu0 0.0
        %553 = vmatprep.subr.mxu0 0.0
        %554 = vmatpush2.msra.mxu0 0.0
        %555 = vmatprep.subr.mxu0 0.0
        %556 = vmatpush2.msra.mxu0 0.0
        %557 = vmatprep.subr.mxu0 0.0
        %558 = vmatpush2.msra.mxu0 0.0
        %559 = vmatprep.subr.mxu0 0.0
        %560 = vmatpush2.msra.mxu0 0.0
        %561 = vmatprep.subr.mxu0 0.0
        %562 = vmatpush2.msra.mxu0 0.0
        %563 = vmatprep.subr.mxu0 0.0
        %564 = vmatpush2.msra.mxu0 0.0
        %565 = vmatprep.subr.mxu0 0.0
        %566 = vmatpush2.msra.mxu0 0.0
        %567 = vmatprep.subr.mxu0 0.0
        %568 = vmatpush2.msra.mxu0 0.0
        %569 = vmatprep.subr.mxu0 0.0
        %570 = vmatpush2.msra.mxu0 0.0
        %571 = vmatprep.mubr.f32.mxu0 0.0
        %v572 = vand.u32 %v351, 4294901760
        %v573 = vsub.f32 %v351, %v572
        %574 = vmatmul.mubr.f32.gmra.mxu0 %v573
        %v575 = vpop.f32.mrf.mxu0
        %v576 = vadd.f32 %v502, %v575
        %v577 = vpop.f32.mrf.mxu0
        %578 = vdwg.mxu0
        %579 = vmatprep.subr.mxu0 0.0
        %580 = vmatpush1.msra.mxu0 0.0
        %581 = vmatprep.subr.mxu0 0.0
        %582 = vmatpush1.msra.mxu0 0.0
        %583 = vmatprep.subr.mxu0 0.0
        %584 = vmatpush1.msra.mxu0 0.0
        %585 = vmatprep.subr.mxu0 0.0
        %586 = vmatpush1.msra.mxu0 0.0
        %587 = vmatprep.subr.mxu0 0.0
        %588 = vmatpush1.msra.mxu0 0.0
        %589 = vmatprep.subr.mxu0 0.0
        %590 = vmatpush1.msra.mxu0 0.0
        %591 = vmatprep.subr.mxu0 0.0
        %592 = vmatpush1.msra.mxu0 0.0
        %593 = vmatprep.subr.mxu0 0.0
        %594 = vmatpush1.msra.mxu0 0.0
        %595 = vmatprep.subr.mxu0 0.0
        %596 = vmatpush1.msra.mxu0 0.0
        %597 = vmatprep.subr.mxu0 0.0
        %598 = vmatpush1.msra.mxu0 0.0
        %599 = vmatprep.subr.mxu0 0.0
        %600 = vmatpush1.msra.mxu0 0.0
        %601 = vmatprep.subr.mxu0 0.0
        %602 = vmatpush1.msra.mxu0 0.0
        %603 = vmatprep.subr.mxu0 0.0
        %604 = vmatpush1.msra.mxu0 0.0
        %605 = vmatprep.subr.mxu0 0.0
        %606 = vmatpush1.msra.mxu0 0.0
        %607 = vmatprep.subr.mxu0 0.0
        %608 = vmatpush1.msra.mxu0 0.0
        %609 = vmatprep.subr.mxu0 0.0
        %v610 = vand.u32 %v340, 4294901760
        %611 = vmatpush1.msra.mxu0 %v610
        %612 = vmatprep.subr.mxu0 0.0
        %613 = vmatpush2.msra.mxu0 0.0
        %614 = vmatprep.subr.mxu0 0.0
        %615 = vmatpush2.msra.mxu0 0.0
        %616 = vmatprep.subr.mxu0 0.0
        %617 = vmatpush2.msra.mxu0 0.0
        %618 = vmatprep.subr.mxu0 0.0
        %619 = vmatpush2.msra.mxu0 0.0
        %620 = vmatprep.subr.mxu0 0.0
        %621 = vmatpush2.msra.mxu0 0.0
        %622 = vmatprep.subr.mxu0 0.0
        %623 = vmatpush2.msra.mxu0 0.0
        %624 = vmatprep.subr.mxu0 0.0
        %625 = vmatpush2.msra.mxu0 0.0
        %626 = vmatprep.subr.mxu0 0.0
        %627 = vmatpush2.msra.mxu0 0.0
        %628 = vmatprep.subr.mxu0 0.0
        %629 = vmatpush2.msra.mxu0 0.0
        %630 = vmatprep.subr.mxu0 0.0
        %631 = vmatpush2.msra.mxu0 0.0
        %632 = vmatprep.subr.mxu0 0.0
        %633 = vmatpush2.msra.mxu0 0.0
        %634 = vmatprep.subr.mxu0 0.0
        %635 = vmatpush2.msra.mxu0 0.0
        %636 = vmatprep.subr.mxu0 0.0
        %637 = vmatpush2.msra.mxu0 0.0
        %638 = vmatprep.subr.mxu0 0.0
        %639 = vmatpush2.msra.mxu0 0.0
        %640 = vmatprep.subr.mxu0 0.0
        %641 = vmatpush2.msra.mxu0 0.0
        %642 = vmatprep.subr.mxu0 0.0
        %643 = vmatpush2.msra.mxu0 0.0
        %644 = vmatprep.mubr.f32.mxu0 0.0
        %v645 = vand.u32 %v351, 4294901760
        %v646 = vsub.f32 %v351, %v645
        %v647 = vand.u32 %v646, 4294901760
        %648 = vmatmul.mubr.f32.gmra.mxu0 %v647
        %v649 = vpop.f32.mrf.mxu0
        %v650 = vadd.f32 %v576, %v649
        %v651 = vpop.f32.mrf.mxu0
        %652 = vdwg.mxu0
        %653 = vmatprep.subr.mxu0 0.0
        %654 = vmatpush1.msra.mxu0 0.0
        %655 = vmatprep.subr.mxu0 0.0
        %656 = vmatpush1.msra.mxu0 0.0
        %657 = vmatprep.subr.mxu0 0.0
        %658 = vmatpush1.msra.mxu0 0.0
        %659 = vmatprep.subr.mxu0 0.0
        %660 = vmatpush1.msra.mxu0 0.0
        %661 = vmatprep.subr.mxu0 0.0
        %662 = vmatpush1.msra.mxu0 0.0
        %663 = vmatprep.subr.mxu0 0.0
        %664 = vmatpush1.msra.mxu0 0.0
        %665 = vmatprep.subr.mxu0 0.0
        %666 = vmatpush1.msra.mxu0 0.0
        %667 = vmatprep.subr.mxu0 0.0
        %668 = vmatpush1.msra.mxu0 0.0
        %669 = vmatprep.subr.mxu0 0.0
        %670 = vmatpush1.msra.mxu0 0.0
        %671 = vmatprep.subr.mxu0 0.0
        %672 = vmatpush1.msra.mxu0 0.0
        %673 = vmatprep.subr.mxu0 0.0
        %674 = vmatpush1.msra.mxu0 0.0
        %675 = vmatprep.subr.mxu0 0.0
        %676 = vmatpush1.msra.mxu0 0.0
        %677 = vmatprep.subr.mxu0 0.0
        %678 = vmatpush1.msra.mxu0 0.0
        %679 = vmatprep.subr.mxu0 0.0
        %680 = vmatpush1.msra.mxu0 0.0
        %681 = vmatprep.subr.mxu0 0.0
        %682 = vmatpush1.msra.mxu0 0.0
        %683 = vmatprep.subr.mxu0 0.0
        %v684 = vand.u32 %v340, 4294901760
        %v685 = vsub.f32 %v340, %v684
        %v686 = vand.u32 %v685, 4294901760
        %687 = vmatpush1.msra.mxu0 %v686
        %688 = vmatprep.subr.mxu0 0.0
        %689 = vmatpush2.msra.mxu0 0.0
        %690 = vmatprep.subr.mxu0 0.0
        %691 = vmatpush2.msra.mxu0 0.0
        %692 = vmatprep.subr.mxu0 0.0
        %693 = vmatpush2.msra.mxu0 0.0
        %694 = vmatprep.subr.mxu0 0.0
        %695 = vmatpush2.msra.mxu0 0.0
        %696 = vmatprep.subr.mxu0 0.0
        %697 = vmatpush2.msra.mxu0 0.0
        %698 = vmatprep.subr.mxu0 0.0
        %699 = vmatpush2.msra.mxu0 0.0
        %700 = vmatprep.subr.mxu0 0.0
        %701 = vmatpush2.msra.mxu0 0.0
        %702 = vmatprep.subr.mxu0 0.0
        %703 = vmatpush2.msra.mxu0 0.0
        %704 = vmatprep.subr.mxu0 0.0
        %705 = vmatpush2.msra.mxu0 0.0
        %706 = vmatprep.subr.mxu0 0.0
        %707 = vmatpush2.msra.mxu0 0.0
        %708 = vmatprep.subr.mxu0 0.0
        %709 = vmatpush2.msra.mxu0 0.0
        %710 = vmatprep.subr.mxu0 0.0
        %711 = vmatpush2.msra.mxu0 0.0
        %712 = vmatprep.subr.mxu0 0.0
        %713 = vmatpush2.msra.mxu0 0.0
        %714 = vmatprep.subr.mxu0 0.0
        %715 = vmatpush2.msra.mxu0 0.0
        %716 = vmatprep.subr.mxu0 0.0
        %717 = vmatpush2.msra.mxu0 0.0
        %718 = vmatprep.subr.mxu0 0.0
        %719 = vmatpush2.msra.mxu0 0.0
        %720 = vmatprep.mubr.f32.mxu0 0.0
        %v721 = vand.u32 %v351, 4294901760
        %722 = vmatmul.mubr.f32.gmra.mxu0 %v721
        %v723 = vpop.f32.mrf.mxu0
        %v724 = vadd.f32 %v650, %v723
        %v725 = vpop.f32.mrf.mxu0
        %726 = vdwg.mxu0
        %727 = vmatprep.subr.mxu0 0.0
        %728 = vmatpush1.msra.mxu0 0.0
        %729 = vmatprep.subr.mxu0 0.0
        %730 = vmatpush1.msra.mxu0 0.0
        %731 = vmatprep.subr.mxu0 0.0
        %732 = vmatpush1.msra.mxu0 0.0
        %733 = vmatprep.subr.mxu0 0.0
        %734 = vmatpush1.msra.mxu0 0.0
        %735 = vmatprep.subr.mxu0 0.0
        %736 = vmatpush1.msra.mxu0 0.0
        %737 = vmatprep.subr.mxu0 0.0
        %738 = vmatpush1.msra.mxu0 0.0
        %739 = vmatprep.subr.mxu0 0.0
        %740 = vmatpush1.msra.mxu0 0.0
        %741 = vmatprep.subr.mxu0 0.0
        %742 = vmatpush1.msra.mxu0 0.0
        %743 = vmatprep.subr.mxu0 0.0
        %744 = vmatpush1.msra.mxu0 0.0
        %745 = vmatprep.subr.mxu0 0.0
        %746 = vmatpush1.msra.mxu0 0.0
        %747 = vmatprep.subr.mxu0 0.0
        %748 = vmatpush1.msra.mxu0 0.0
        %749 = vmatprep.subr.mxu0 0.0
        %750 = vmatpush1.msra.mxu0 0.0
        %751 = vmatprep.subr.mxu0 0.0
        %752 = vmatpush1.msra.mxu0 0.0
        %753 = vmatprep.subr.mxu0 0.0
        %754 = vmatpush1.msra.mxu0 0.0
        %755 = vmatprep.subr.mxu0 0.0
        %756 = vmatpush1.msra.mxu0 0.0
        %757 = vmatprep.subr.mxu0 0.0
        %v758 = vand.u32 %v340, 4294901760
        %759 = vmatpush1.msra.mxu0 %v758
        %760 = vmatprep.subr.mxu0 0.0
        %761 = vmatpush2.msra.mxu0 0.0
        %762 = vmatprep.subr.mxu0 0.0
        %763 = vmatpush2.msra.mxu0 0.0
        %764 = vmatprep.subr.mxu0 0.0
        %765 = vmatpush2.msra.mxu0 0.0
        %766 = vmatprep.subr.mxu0 0.0
        %767 = vmatpush2.msra.mxu0 0.0
        %768 = vmatprep.subr.mxu0 0.0
        %769 = vmatpush2.msra.mxu0 0.0
        %770 = vmatprep.subr.mxu0 0.0
        %771 = vmatpush2.msra.mxu0 0.0
        %772 = vmatprep.subr.mxu0 0.0
        %773 = vmatpush2.msra.mxu0 0.0
        %774 = vmatprep.subr.mxu0 0.0
        %775 = vmatpush2.msra.mxu0 0.0
        %776 = vmatprep.subr.mxu0 0.0
        %777 = vmatpush2.msra.mxu0 0.0
        %778 = vmatprep.subr.mxu0 0.0
        %779 = vmatpush2.msra.mxu0 0.0
        %780 = vmatprep.subr.mxu0 0.0
        %781 = vmatpush2.msra.mxu0 0.0
        %782 = vmatprep.subr.mxu0 0.0
        %783 = vmatpush2.msra.mxu0 0.0
        %784 = vmatprep.subr.mxu0 0.0
        %785 = vmatpush2.msra.mxu0 0.0
        %786 = vmatprep.subr.mxu0 0.0
        %787 = vmatpush2.msra.mxu0 0.0
        %788 = vmatprep.subr.mxu0 0.0
        %789 = vmatpush2.msra.mxu0 0.0
        %790 = vmatprep.subr.mxu0 0.0
        %791 = vmatpush2.msra.mxu0 0.0
        %792 = vmatprep.mubr.f32.mxu0 0.0
        %v793 = vand.u32 %v351, 4294901760
        %794 = vmatmul.mubr.f32.gmra.mxu0 %v793
        %v795 = vpop.f32.mrf.mxu0
        %v796 = vadd.f32 %v724, %v795
        %v797 = vpop.f32.mrf.mxu0
        %798 = vdwg.mxu0
        %v799 = vadd.f32 %v348, %v796
        %vm800 = vcmask 253952
        %801 = vst.msk [vmem:[#allocation3] sm:$0x1] %vm800, %v799
        %v802 = vld [vmem:[#allocation4] sm:$0x1]
        %v803 = vmul.f32 %v340, %v340
        %804 = vmatprep.subr.mxu0 0.0
        %805 = vmatpush1.msra.mxu0 0.0
        %806 = vmatprep.subr.mxu0 0.0
        %807 = vmatpush1.msra.mxu0 0.0
        %808 = vmatprep.subr.mxu0 0.0
        %809 = vmatpush1.msra.mxu0 0.0
        %810 = vmatprep.subr.mxu0 0.0
        %811 = vmatpush1.msra.mxu0 0.0
        %812 = vmatprep.subr.mxu0 0.0
        %813 = vmatpush1.msra.mxu0 0.0
        %814 = vmatprep.subr.mxu0 0.0
        %815 = vmatpush1.msra.mxu0 0.0
        %816 = vmatprep.subr.mxu0 0.0
        %817 = vmatpush1.msra.mxu0 0.0
        %818 = vmatprep.subr.mxu0 0.0
        %819 = vmatpush1.msra.mxu0 0.0
        %820 = vmatprep.subr.mxu0 0.0
        %821 = vmatpush1.msra.mxu0 0.0
        %822 = vmatprep.subr.mxu0 0.0
        %823 = vmatpush1.msra.mxu0 0.0
        %824 = vmatprep.subr.mxu0 0.0
        %825 = vmatpush1.msra.mxu0 0.0
        %826 = vmatprep.subr.mxu0 0.0
        %827 = vmatpush1.msra.mxu0 0.0
        %828 = vmatprep.subr.mxu0 0.0
        %829 = vmatpush1.msra.mxu0 0.0
        %830 = vmatprep.subr.mxu0 0.0
        %831 = vmatpush1.msra.mxu0 0.0
        %832 = vmatprep.subr.mxu0 0.0
        %833 = vmatpush1.msra.mxu0 0.0
        %834 = vmatprep.subr.mxu0 0.0
        %v835 = vand.u32 %v803, 4294901760
        %836 = vmatpush1.msra.mxu0 %v835
        %837 = vmatprep.subr.mxu0 0.0
        %838 = vmatpush2.msra.mxu0 0.0
        %839 = vmatprep.subr.mxu0 0.0
        %840 = vmatpush2.msra.mxu0 0.0
        %841 = vmatprep.subr.mxu0 0.0
        %842 = vmatpush2.msra.mxu0 0.0
        %843 = vmatprep.subr.mxu0 0.0
        %844 = vmatpush2.msra.mxu0 0.0
        %845 = vmatprep.subr.mxu0 0.0
        %846 = vmatpush2.msra.mxu0 0.0
        %847 = vmatprep.subr.mxu0 0.0
        %848 = vmatpush2.msra.mxu0 0.0
        %849 = vmatprep.subr.mxu0 0.0
        %850 = vmatpush2.msra.mxu0 0.0
        %851 = vmatprep.subr.mxu0 0.0
        %852 = vmatpush2.msra.mxu0 0.0
        %853 = vmatprep.subr.mxu0 0.0
        %854 = vmatpush2.msra.mxu0 0.0
        %855 = vmatprep.subr.mxu0 0.0
        %856 = vmatpush2.msra.mxu0 0.0
        %857 = vmatprep.subr.mxu0 0.0
        %858 = vmatpush2.msra.mxu0 0.0
        %859 = vmatprep.subr.mxu0 0.0
        %860 = vmatpush2.msra.mxu0 0.0
        %861 = vmatprep.subr.mxu0 0.0
        %862 = vmatpush2.msra.mxu0 0.0
        %863 = vmatprep.subr.mxu0 0.0
        %864 = vmatpush2.msra.mxu0 0.0
        %865 = vmatprep.subr.mxu0 0.0
        %866 = vmatpush2.msra.mxu0 0.0
        %867 = vmatprep.subr.mxu0 0.0
        %868 = vmatpush2.msra.mxu0 0.0
        %869 = vmatprep.mubr.f32.mxu0 0.0
        %v870 = vand.u32 %v351, 4294901760
        %v871 = vsub.f32 %v351, %v870
        %v872 = vand.u32 %v871, 4294901760
        %v873 = vsub.f32 %v871, %v872
        %v874 = vand.u32 %v873, 4294901760
        %875 = vmatmul.mubr.f32.gmra.mxu0 %v874
        %v876 = vpop.f32.mrf.mxu0
        %v877 = vadd.f32 0.0, %v876
        %v878 = vpop.f32.mrf.mxu0
        %879 = vdwg.mxu0
        %880 = vmatprep.subr.mxu0 0.0
        %881 = vmatpush1.msra.mxu0 0.0
        %882 = vmatprep.subr.mxu0 0.0
        %883 = vmatpush1.msra.mxu0 0.0
        %884 = vmatprep.subr.mxu0 0.0
        %885 = vmatpush1.msra.mxu0 0.0
        %886 = vmatprep.subr.mxu0 0.0
        %887 = vmatpush1.msra.mxu0 0.0
        %888 = vmatprep.subr.mxu0 0.0
        %889 = vmatpush1.msra.mxu0 0.0
        %890 = vmatprep.subr.mxu0 0.0
        %891 = vmatpush1.msra.mxu0 0.0
        %892 = vmatprep.subr.mxu0 0.0
        %893 = vmatpush1.msra.mxu0 0.0
        %894 = vmatprep.subr.mxu0 0.0
        %895 = vmatpush1.msra.mxu0 0.0
        %896 = vmatprep.subr.mxu0 0.0
        %897 = vmatpush1.msra.mxu0 0.0
        %898 = vmatprep.subr.mxu0 0.0
        %899 = vmatpush1.msra.mxu0 0.0
        %900 = vmatprep.subr.mxu0 0.0
        %901 = vmatpush1.msra.mxu0 0.0
        %902 = vmatprep.subr.mxu0 0.0
        %903 = vmatpush1.msra.mxu0 0.0
        %904 = vmatprep.subr.mxu0 0.0
        %905 = vmatpush1.msra.mxu0 0.0
        %906 = vmatprep.subr.mxu0 0.0
        %907 = vmatpush1.msra.mxu0 0.0
        %908 = vmatprep.subr.mxu0 0.0
        %909 = vmatpush1.msra.mxu0 0.0
        %910 = vmatprep.subr.mxu0 0.0
        %v911 = vand.u32 %v803, 4294901760
        %v912 = vsub.f32 %v803, %v911
        %v913 = vand.u32 %v912, 4294901760
        %v914 = vsub.f32 %v912, %v913
        %v915 = vand.u32 %v914, 4294901760
        %916 = vmatpush1.msra.mxu0 %v915
        %917 = vmatprep.subr.mxu0 0.0
        %918 = vmatpush2.msra.mxu0 0.0
        %919 = vmatprep.subr.mxu0 0.0
        %920 = vmatpush2.msra.mxu0 0.0
        %921 = vmatprep.subr.mxu0 0.0
        %922 = vmatpush2.msra.mxu0 0.0
        %923 = vmatprep.subr.mxu0 0.0
        %924 = vmatpush2.msra.mxu0 0.0
        %925 = vmatprep.subr.mxu0 0.0
        %926 = vmatpush2.msra.mxu0 0.0
        %927 = vmatprep.subr.mxu0 0.0
        %928 = vmatpush2.msra.mxu0 0.0
        %929 = vmatprep.subr.mxu0 0.0
        %930 = vmatpush2.msra.mxu0 0.0
        %931 = vmatprep.subr.mxu0 0.0
        %932 = vmatpush2.msra.mxu0 0.0
        %933 = vmatprep.subr.mxu0 0.0
        %934 = vmatpush2.msra.mxu0 0.0
        %935 = vmatprep.subr.mxu0 0.0
        %936 = vmatpush2.msra.mxu0 0.0
        %937 = vmatprep.subr.mxu0 0.0
        %938 = vmatpush2.msra.mxu0 0.0
        %939 = vmatprep.subr.mxu0 0.0
        %940 = vmatpush2.msra.mxu0 0.0
        %941 = vmatprep.subr.mxu0 0.0
        %942 = vmatpush2.msra.mxu0 0.0
        %943 = vmatprep.subr.mxu0 0.0
        %944 = vmatpush2.msra.mxu0 0.0
        %945 = vmatprep.subr.mxu0 0.0
        %946 = vmatpush2.msra.mxu0 0.0
        %947 = vmatprep.subr.mxu0 0.0
        %948 = vmatpush2.msra.mxu0 0.0
        %949 = vmatprep.mubr.f32.mxu0 0.0
        %v950 = vand.u32 %v351, 4294901760
        %951 = vmatmul.mubr.f32.gmra.mxu0 %v950
        %v952 = vpop.f32.mrf.mxu0
        %v953 = vadd.f32 %v877, %v952
        %v954 = vpop.f32.mrf.mxu0
        %955 = vdwg.mxu0
        %956 = vmatprep.subr.mxu0 0.0
        %957 = vmatpush1.msra.mxu0 0.0
        %958 = vmatprep.subr.mxu0 0.0
        %959 = vmatpush1.msra.mxu0 0.0
        %960 = vmatprep.subr.mxu0 0.0
        %961 = vmatpush1.msra.mxu0 0.0
        %962 = vmatprep.subr.mxu0 0.0
        %963 = vmatpush1.msra.mxu0 0.0
        %964 = vmatprep.subr.mxu0 0.0
        %965 = vmatpush1.msra.mxu0 0.0
        %966 = vmatprep.subr.mxu0 0.0
        %967 = vmatpush1.msra.mxu0 0.0
        %968 = vmatprep.subr.mxu0 0.0
        %969 = vmatpush1.msra.mxu0 0.0
        %970 = vmatprep.subr.mxu0 0.0
        %971 = vmatpush1.msra.mxu0 0.0
        %972 = vmatprep.subr.mxu0 0.0
        %973 = vmatpush1.msra.mxu0 0.0
        %974 = vmatprep.subr.mxu0 0.0
        %975 = vmatpush1.msra.mxu0 0.0
        %976 = vmatprep.subr.mxu0 0.0
        %977 = vmatpush1.msra.mxu0 0.0
        %978 = vmatprep.subr.mxu0 0.0
        %979 = vmatpush1.msra.mxu0 0.0
        %980 = vmatprep.subr.mxu0 0.0
        %981 = vmatpush1.msra.mxu0 0.0
        %982 = vmatprep.subr.mxu0 0.0
        %983 = vmatpush1.msra.mxu0 0.0
        %984 = vmatprep.subr.mxu0 0.0
        %985 = vmatpush1.msra.mxu0 0.0
        %986 = vmatprep.subr.mxu0 0.0
        %v987 = vand.u32 %v803, 4294901760
        %v988 = vsub.f32 %v803, %v987
        %989 = vmatpush1.msra.mxu0 %v988
        %990 = vmatprep.subr.mxu0 0.0
        %991 = vmatpush2.msra.mxu0 0.0
        %992 = vmatprep.subr.mxu0 0.0
        %993 = vmatpush2.msra.mxu0 0.0
        %994 = vmatprep.subr.mxu0 0.0
        %995 = vmatpush2.msra.mxu0 0.0
        %996 = vmatprep.subr.mxu0 0.0
        %997 = vmatpush2.msra.mxu0 0.0
        %998 = vmatprep.subr.mxu0 0.0
        %999 = vmatpush2.msra.mxu0 0.0
        %1000 = vmatprep.subr.mxu0 0.0
        %1001 = vmatpush2.msra.mxu0 0.0
        %1002 = vmatprep.subr.mxu0 0.0
        %1003 = vmatpush2.msra.mxu0 0.0
        %1004 = vmatprep.subr.mxu0 0.0
        %1005 = vmatpush2.msra.mxu0 0.0
        %1006 = vmatprep.subr.mxu0 0.0
        %1007 = vmatpush2.msra.mxu0 0.0
        %1008 = vmatprep.subr.mxu0 0.0
        %1009 = vmatpush2.msra.mxu0 0.0
        %1010 = vmatprep.subr.mxu0 0.0
        %1011 = vmatpush2.msra.mxu0 0.0
        %1012 = vmatprep.subr.mxu0 0.0
        %1013 = vmatpush2.msra.mxu0 0.0
        %1014 = vmatprep.subr.mxu0 0.0
        %1015 = vmatpush2.msra.mxu0 0.0
        %1016 = vmatprep.subr.mxu0 0.0
        %1017 = vmatpush2.msra.mxu0 0.0
        %1018 = vmatprep.subr.mxu0 0.0
        %1019 = vmatpush2.msra.mxu0 0.0
        %1020 = vmatprep.subr.mxu0 0.0
        %1021 = vmatpush2.msra.mxu0 0.0
        %1022 = vmatprep.mubr.f32.mxu0 0.0
        %v1023 = vand.u32 %v351, 4294901760
        %v1024 = vsub.f32 %v351, %v1023
        %1025 = vmatmul.mubr.f32.gmra.mxu0 %v1024
        %v1026 = vpop.f32.mrf.mxu0
        %v1027 = vadd.f32 %v953, %v1026
        %v1028 = vpop.f32.mrf.mxu0
        %1029 = vdwg.mxu0
        %1030 = vmatprep.subr.mxu0 0.0
        %1031 = vmatpush1.msra.mxu0 0.0
        %1032 = vmatprep.subr.mxu0 0.0
        %1033 = vmatpush1.msra.mxu0 0.0
        %1034 = vmatprep.subr.mxu0 0.0
        %1035 = vmatpush1.msra.mxu0 0.0
        %1036 = vmatprep.subr.mxu0 0.0
        %1037 = vmatpush1.msra.mxu0 0.0
        %1038 = vmatprep.subr.mxu0 0.0
        %1039 = vmatpush1.msra.mxu0 0.0
        %1040 = vmatprep.subr.mxu0 0.0
        %1041 = vmatpush1.msra.mxu0 0.0
        %1042 = vmatprep.subr.mxu0 0.0
        %1043 = vmatpush1.msra.mxu0 0.0
        %1044 = vmatprep.subr.mxu0 0.0
        %1045 = vmatpush1.msra.mxu0 0.0
        %1046 = vmatprep.subr.mxu0 0.0
        %1047 = vmatpush1.msra.mxu0 0.0
        %1048 = vmatprep.subr.mxu0 0.0
        %1049 = vmatpush1.msra.mxu0 0.0
        %1050 = vmatprep.subr.mxu0 0.0
        %1051 = vmatpush1.msra.mxu0 0.0
        %1052 = vmatprep.subr.mxu0 0.0
        %1053 = vmatpush1.msra.mxu0 0.0
        %1054 = vmatprep.subr.mxu0 0.0
        %1055 = vmatpush1.msra.mxu0 0.0
        %1056 = vmatprep.subr.mxu0 0.0
        %1057 = vmatpush1.msra.mxu0 0.0
        %1058 = vmatprep.subr.mxu0 0.0
        %1059 = vmatpush1.msra.mxu0 0.0
        %1060 = vmatprep.subr.mxu0 0.0
        %v1061 = vand.u32 %v803, 4294901760
        %1062 = vmatpush1.msra.mxu0 %v1061
        %1063 = vmatprep.subr.mxu0 0.0
        %1064 = vmatpush2.msra.mxu0 0.0
        %1065 = vmatprep.subr.mxu0 0.0
        %1066 = vmatpush2.msra.mxu0 0.0
        %1067 = vmatprep.subr.mxu0 0.0
        %1068 = vmatpush2.msra.mxu0 0.0
        %1069 = vmatprep.subr.mxu0 0.0
        %1070 = vmatpush2.msra.mxu0 0.0
        %1071 = vmatprep.subr.mxu0 0.0
        %1072 = vmatpush2.msra.mxu0 0.0
        %1073 = vmatprep.subr.mxu0 0.0
        %1074 = vmatpush2.msra.mxu0 0.0
        %1075 = vmatprep.subr.mxu0 0.0
        %1076 = vmatpush2.msra.mxu0 0.0
        %1077 = vmatprep.subr.mxu0 0.0
        %1078 = vmatpush2.msra.mxu0 0.0
        %1079 = vmatprep.subr.mxu0 0.0
        %1080 = vmatpush2.msra.mxu0 0.0
        %1081 = vmatprep.subr.mxu0 0.0
        %1082 = vmatpush2.msra.mxu0 0.0
        %1083 = vmatprep.subr.mxu0 0.0
        %1084 = vmatpush2.msra.mxu0 0.0
        %1085 = vmatprep.subr.mxu0 0.0
        %1086 = vmatpush2.msra.mxu0 0.0
        %1087 = vmatprep.subr.mxu0 0.0
        %1088 = vmatpush2.msra.mxu0 0.0
        %1089 = vmatprep.subr.mxu0 0.0
        %1090 = vmatpush2.msra.mxu0 0.0
        %1091 = vmatprep.subr.mxu0 0.0
        %1092 = vmatpush2.msra.mxu0 0.0
        %1093 = vmatprep.subr.mxu0 0.0
        %1094 = vmatpush2.msra.mxu0 0.0
        %1095 = vmatprep.mubr.f32.mxu0 0.0
        %v1096 = vand.u32 %v351, 4294901760
        %v1097 = vsub.f32 %v351, %v1096
        %v1098 = vand.u32 %v1097, 4294901760
        %1099 = vmatmul.mubr.f32.gmra.mxu0 %v1098
        %v1100 = vpop.f32.mrf.mxu0
        %v1101 = vadd.f32 %v1027, %v1100
        %v1102 = vpop.f32.mrf.mxu0
        %1103 = vdwg.mxu0
        %1104 = vmatprep.subr.mxu0 0.0
        %1105 = vmatpush1.msra.mxu0 0.0
        %1106 = vmatprep.subr.mxu0 0.0
        %1107 = vmatpush1.msra.mxu0 0.0
        %1108 = vmatprep.subr.mxu0 0.0
        %1109 = vmatpush1.msra.mxu0 0.0
        %1110 = vmatprep.subr.mxu0 0.0
        %1111 = vmatpush1.msra.mxu0 0.0
        %1112 = vmatprep.subr.mxu0 0.0
        %1113 = vmatpush1.msra.mxu0 0.0
        %1114 = vmatprep.subr.mxu0 0.0
        %1115 = vmatpush1.msra.mxu0 0.0
        %1116 = vmatprep.subr.mxu0 0.0
        %1117 = vmatpush1.msra.mxu0 0.0
        %1118 = vmatprep.subr.mxu0 0.0
        %1119 = vmatpush1.msra.mxu0 0.0
        %1120 = vmatprep.subr.mxu0 0.0
        %1121 = vmatpush1.msra.mxu0 0.0
        %1122 = vmatprep.subr.mxu0 0.0
        %1123 = vmatpush1.msra.mxu0 0.0
        %1124 = vmatprep.subr.mxu0 0.0
        %1125 = vmatpush1.msra.mxu0 0.0
        %1126 = vmatprep.subr.mxu0 0.0
        %1127 = vmatpush1.msra.mxu0 0.0
        %1128 = vmatprep.subr.mxu0 0.0
        %1129 = vmatpush1.msra.mxu0 0.0
        %1130 = vmatprep.subr.mxu0 0.0
        %1131 = vmatpush1.msra.mxu0 0.0
        %1132 = vmatprep.subr.mxu0 0.0
        %1133 = vmatpush1.msra.mxu0 0.0
        %1134 = vmatprep.subr.mxu0 0.0
        %v1135 = vand.u32 %v803, 4294901760
        %v1136 = vsub.f32 %v803, %v1135
        %v1137 = vand.u32 %v1136, 4294901760
        %1138 = vmatpush1.msra.mxu0 %v1137
        %1139 = vmatprep.subr.mxu0 0.0
        %1140 = vmatpush2.msra.mxu0 0.0
        %1141 = vmatprep.subr.mxu0 0.0
        %1142 = vmatpush2.msra.mxu0 0.0
        %1143 = vmatprep.subr.mxu0 0.0
        %1144 = vmatpush2.msra.mxu0 0.0
        %1145 = vmatprep.subr.mxu0 0.0
        %1146 = vmatpush2.msra.mxu0 0.0
        %1147 = vmatprep.subr.mxu0 0.0
        %1148 = vmatpush2.msra.mxu0 0.0
        %1149 = vmatprep.subr.mxu0 0.0
        %1150 = vmatpush2.msra.mxu0 0.0
        %1151 = vmatprep.subr.mxu0 0.0
        %1152 = vmatpush2.msra.mxu0 0.0
        %1153 = vmatprep.subr.mxu0 0.0
        %1154 = vmatpush2.msra.mxu0 0.0
        %1155 = vmatprep.subr.mxu0 0.0
        %1156 = vmatpush2.msra.mxu0 0.0
        %1157 = vmatprep.subr.mxu0 0.0
        %1158 = vmatpush2.msra.mxu0 0.0
        %1159 = vmatprep.subr.mxu0 0.0
        %1160 = vmatpush2.msra.mxu0 0.0
        %1161 = vmatprep.subr.mxu0 0.0
        %1162 = vmatpush2.msra.mxu0 0.0
        %1163 = vmatprep.subr.mxu0 0.0
        %1164 = vmatpush2.msra.mxu0 0.0
        %1165 = vmatprep.subr.mxu0 0.0
        %1166 = vmatpush2.msra.mxu0 0.0
        %1167 = vmatprep.subr.mxu0 0.0
        %1168 = vmatpush2.msra.mxu0 0.0
        %1169 = vmatprep.subr.mxu0 0.0
        %1170 = vmatpush2.msra.mxu0 0.0
        %1171 = vmatprep.mubr.f32.mxu0 0.0
        %v1172 = vand.u32 %v351, 4294901760
        %1173 = vmatmul.mubr.f32.gmra.mxu0 %v1172
        %v1174 = vpop.f32.mrf.mxu0
        %v1175 = vadd.f32 %v1101, %v1174
        %v1176 = vpop.f32.mrf.mxu0
        %1177 = vdwg.mxu0
        %1178 = vmatprep.subr.mxu0 0.0
        %1179 = vmatpush1.msra.mxu0 0.0
        %1180 = vmatprep.subr.mxu0 0.0
        %1181 = vmatpush1.msra.mxu0 0.0
        %1182 = vmatprep.subr.mxu0 0.0
        %1183 = vmatpush1.msra.mxu0 0.0
        %1184 = vmatprep.subr.mxu0 0.0
        %1185 = vmatpush1.msra.mxu0 0.0
        %1186 = vmatprep.subr.mxu0 0.0
        %1187 = vmatpush1.msra.mxu0 0.0
        %1188 = vmatprep.subr.mxu0 0.0
        %1189 = vmatpush1.msra.mxu0 0.0
        %1190 = vmatprep.subr.mxu0 0.0
        %1191 = vmatpush1.msra.mxu0 0.0
        %1192 = vmatprep.subr.mxu0 0.0
        %1193 = vmatpush1.msra.mxu0 0.0
        %1194 = vmatprep.subr.mxu0 0.0
        %1195 = vmatpush1.msra.mxu0 0.0
        %1196 = vmatprep.subr.mxu0 0.0
        %1197 = vmatpush1.msra.mxu0 0.0
        %1198 = vmatprep.subr.mxu0 0.0
        %1199 = vmatpush1.msra.mxu0 0.0
        %1200 = vmatprep.subr.mxu0 0.0
        %1201 = vmatpush1.msra.mxu0 0.0
        %1202 = vmatprep.subr.mxu0 0.0
        %1203 = vmatpush1.msra.mxu0 0.0
        %1204 = vmatprep.subr.mxu0 0.0
        %1205 = vmatpush1.msra.mxu0 0.0
        %1206 = vmatprep.subr.mxu0 0.0
        %1207 = vmatpush1.msra.mxu0 0.0
        %1208 = vmatprep.subr.mxu0 0.0
        %v1209 = vand.u32 %v803, 4294901760
        %1210 = vmatpush1.msra.mxu0 %v1209
        %1211 = vmatprep.subr.mxu0 0.0
        %1212 = vmatpush2.msra.mxu0 0.0
        %1213 = vmatprep.subr.mxu0 0.0
        %1214 = vmatpush2.msra.mxu0 0.0
        %1215 = vmatprep.subr.mxu0 0.0
        %1216 = vmatpush2.msra.mxu0 0.0
        %1217 = vmatprep.subr.mxu0 0.0
        %1218 = vmatpush2.msra.mxu0 0.0
        %1219 = vmatprep.subr.mxu0 0.0
        %1220 = vmatpush2.msra.mxu0 0.0
        %1221 = vmatprep.subr.mxu0 0.0
        %1222 = vmatpush2.msra.mxu0 0.0
        %1223 = vmatprep.subr.mxu0 0.0
        %1224 = vmatpush2.msra.mxu0 0.0
        %1225 = vmatprep.subr.mxu0 0.0
        %1226 = vmatpush2.msra.mxu0 0.0
        %1227 = vmatprep.subr.mxu0 0.0
        %1228 = vmatpush2.msra.mxu0 0.0
        %1229 = vmatprep.subr.mxu0 0.0
        %1230 = vmatpush2.msra.mxu0 0.0
        %1231 = vmatprep.subr.mxu0 0.0
        %1232 = vmatpush2.msra.mxu0 0.0
        %1233 = vmatprep.subr.mxu0 0.0
        %1234 = vmatpush2.msra.mxu0 0.0
        %1235 = vmatprep.subr.mxu0 0.0
        %1236 = vmatpush2.msra.mxu0 0.0
        %1237 = vmatprep.subr.mxu0 0.0
        %1238 = vmatpush2.msra.mxu0 0.0
        %1239 = vmatprep.subr.mxu0 0.0
        %1240 = vmatpush2.msra.mxu0 0.0
        %1241 = vmatprep.subr.mxu0 0.0
        %1242 = vmatpush2.msra.mxu0 0.0
        %1243 = vmatprep.mubr.f32.mxu0 0.0
        %v1244 = vand.u32 %v351, 4294901760
        %1245 = vmatmul.mubr.f32.gmra.mxu0 %v1244
        %v1246 = vpop.f32.mrf.mxu0
        %v1247 = vadd.f32 %v1175, %v1246
        %v1248 = vpop.f32.mrf.mxu0
        %1249 = vdwg.mxu0
        %v1250 = vadd.f32 %v802, %v1247
        %1251 = vst.msk [vmem:[#allocation4] sm:$0x1] %vm800, %v1250
        // Predicated region
        $region53: #{projectile_forward.1} parent=47 // pred_check
          %p1252 = pneg %p284
        $region54: #{projectile_forward.1} parent=47 // pred_check_branch
          %1254 = sbr.rel (%p1252) target = $region56
        $region55: #{projectile_forward.1} parent=47 // pred_region
          %v1255 = vld [vmem:[#allocation3] sm:$0x1]
          %v1256 = vmul.f32 %v1255, 0.125
          %v1257 = vld [vmem:[#allocation4] sm:$0x1]
          %v1258 = vmul.f32 %v1257, 0.125
          %v1259 = vmul.f32 %v1256, %v1256
          %v1260 = vsub.f32 %v1258, %v1259
          %v1261 = vmax.f32 %v1260, 0.0
          %v1262 = vld [vmem:[%s2] sm:$0x1]
          %v1263 = vadd.f32 %v1261, 1e-05
          %v1264 = vrsqrt.pop %v1263
          %v1265 = vmul.f32 %v1262, %v1264
          %1266 = vst.msk [vmem:[#allocation5] sm:$0x1] %vm800, %v1265
          %v1267 = vld [vmem:[%s3] sm:$0x1]
          %v1268 = vmul.f32 %v1256, %v1265
          %v1269 = vsub.f32 %v1267, %v1268
          %1270 = vst.msk [vmem:[#allocation6] sm:$0x1] %vm800, %v1269
        $region56: #{projectile_forward.1} parent=47 // pred_fallthru
          _
      $region48: #{projectile_forward.1} parent=43 // pred_fallthru
        _
      %p1271 = scmp.eq.s32.totalorder %s21, 1
      // Predicated region
      $region57: #{projectile_forward.1} parent=43 // pred_check
        %p1272 = pneg %p1271
      $region58: #{projectile_forward.1} parent=43 // pred_check_branch
        %1274 = sbr.rel (%p1272) target = $region60
      $region59: #{projectile_forward.1} parent=43 // pred_region
        %s1275 = scalar_lea.vmem [#allocation2], %s279
        %v1276 = vld [vmem:[%s1275] sm:$0xff]
        %v1277 = vld [vmem:[#allocation5] sm:$0x1]
        %v1279 = vlaneseq
        %v1280 = vshrl.u32 %v1279, 7
        %v1281 = vsub.s32 0, %v1280
        %v1282 = vrot.slane %v1277, %v1281
        %v1284 = vmul.f32 %v1276, %v1282
        %v1285 = vld [vmem:[#allocation6] sm:$0x1]
        %v1287 = vlaneseq
        %v1288 = vshrl.u32 %v1287, 7
        %v1289 = vsub.s32 0, %v1288
        %v1290 = vrot.slane %v1285, %v1289
        %v1292 = vadd.f32 %v1284, %v1290
        %v1293 = vmax.f32 %v1292, 0.0
        %v1294 = vpack.c.bf16 %v1293, %v1293
        %v1295 = vld [vmem:[%s4] sm:$0xf]
        %v1296 = vld [vmem:[%s4 + $0x4] sm:$0xf]
        %v1297 = vld [vmem:[%s4 + $0x8] sm:$0xf]
        %v1298 = vld [vmem:[%s4 + $0xc] sm:$0xf]
        %v1299 = vld [vmem:[%s5] sm:$0x1]
        %v1301 = vlaneseq
        %v1302 = vshrl.u32 %v1301, 7
        %v1303 = vsub.s32 0, %v1302
        %v1304 = vrot.slane %v1299, %v1303
        %v1310 = vunpack.c.l.b16 %v1295
        %v1311 = vunpack.c.l.b16 %v1296
        %v1312 = vunpack.c.l.b16 %v1297
        %v1313 = vunpack.c.l.b16 %v1298
        %v1314 = vpack.c.b16 %v1311, %v1310
        %v1315 = vpack.c.b16 %v1313, %v1312
        %vm1318 = vcmask 261120
        %v1320 = vsel %vm1318, %v1294, 0
        %1322 = vmatprep.subr.bf16.mxu0 0
        %1323 = vmatpush1.bf16.msra.mxu0 0
        %1324 = vmatprep.subr.bf16.mxu0 0
        %1325 = vmatpush1.bf16.msra.mxu0 0
        %1326 = vmatprep.subr.bf16.mxu0 0
        %1327 = vmatpush1.bf16.msra.mxu0 0
        %1328 = vmatprep.subr.bf16.mxu0 0
        %1329 = vmatpush1.bf16.msra.mxu0 0
        %1330 = vmatprep.subr.bf16.mxu0 0
        %1331 = vmatpush1.bf16.msra.mxu0 0
        %1332 = vmatprep.subr.bf16.mxu0 0
        %1333 = vmatpush1.bf16.msra.mxu0 0
        %1334 = vmatprep.subr.bf16.mxu0 0
        %1335 = vmatpush1.bf16.msra.mxu0 %v1315
        %1336 = vmatprep.subr.bf16.mxu0 0
        %1337 = vmatpush1.bf16.msra.mxu0 %v1314
        %1338 = vmatprep.subr.bf16.mxu0 0
        %1339 = vmatpush2.bf16.msra.mxu0 0
        %1340 = vmatprep.subr.bf16.mxu0 0
        %1341 = vmatpush2.bf16.msra.mxu0 0
        %1342 = vmatprep.subr.bf16.mxu0 0
        %1343 = vmatpush2.bf16.msra.mxu0 0
        %1344 = vmatprep.subr.bf16.mxu0 0
        %1345 = vmatpush2.bf16.msra.mxu0 0
        %1346 = vmatprep.subr.bf16.mxu0 0
        %1347 = vmatpush2.bf16.msra.mxu0 0
        %1348 = vmatprep.subr.bf16.mxu0 0
        %1349 = vmatpush2.bf16.msra.mxu0 0
        %1350 = vmatprep.subr.bf16.mxu0 0
        %1351 = vmatpush2.bf16.msra.mxu0 0
        %1352 = vmatprep.subr.bf16.mxu0 0
        %1353 = vmatpush2.bf16.msra.mxu0 0
        %1354 = vmatprep.mubr.bf16.mxu0 0
        %1355 = vmatmul.mubr.bf16.gmra.mxu0 %v1320
        %v1356 = vpop.f32.mrf.mxu0
        %v1357 = vadd.f32 %v1304, %v1356
        %v1358 = vpop.f32.mrf.mxu0
        %v1359 = vpop.f32.mrf.mxu0
        %v1360 = vpop.f32.mrf.mxu0
        %1361 = vdwg.mxu0
        %v1362 = vxor.u32 %v1357, 2147483648
        %v1363 = vmul.f32 %v1362, 1.442695
        %v1364 = vpow.pop %v1363
        %v1365 = vadd.f32 %v1364, 1.0
        %v1366 = vrcp.pop %v1365
        %v1367 = vmul.f32 1.0, %v1366
        %vm1368 = vcmask 64512
        %1369 = vst.msk [vmem:[%s276] sm:$0xff] %vm1368, %v1367
      $region60: #{projectile_forward.1} parent=43 // pred_fallthru
        _
      %s1370 = smul.u32 %s22, %s21
      %p1371 = scmp.lt.s32.totalorder %s1370, 0
      %s1372 = scalar_select %p1371, %s1370, 0
      %s1373 = smul.addr %s1372, 8
      %s1374 = scalar_lea.vmem %s6, %s1373
      // Predicated region
      $region61: #{projectile_forward.1} parent=43 // pred_check
        %p1375 = pneg %p184
      $region62: #{projectile_forward.1} parent=43 // pred_check_branch
        %1377 = sbr.rel (%p1375) target = $region64
      $region63: #{projectile_forward.1} parent=43 // pred_region
        %s1378 = smul.u32 %s22, %s21
      $region64: #{projectile_forward.1} parent=43 // pred_fallthru
        _
    $region44: #{projectile_forward.1} parent=5 // pred_fallthru
      _
    %p1379 = scmp.le.s32.totalorder 2, %s12
    // Predicated region
    $region65: #{projectile_forward.1} parent=5 // pred_check
      %p1380 = pneg %p1379
    $region66: #{projectile_forward.1} parent=5 // pred_check_branch
      %1382 = sbr.rel (%p1380) target = $region68
    $region67: #{projectile_forward.1} parent=5 // pred_region
      %s1383 = ssub.s32 %s12, 2
      // Predicated region
      $region69: #{projectile_forward.1} parent=67 // pred_check
        %p1384 = pneg %p190
      $region70: #{projectile_forward.1} parent=67 // pred_check_branch
        %1386 = sbr.rel (%p1384) target = $region72
      $region71: #{projectile_forward.1} parent=67 // pred_region
        %s1387 = smul.u32 %s24, %s23
        %p1388 = scmp.lt.s32.totalorder %s1387, 0
        %s1389 = scalar_select %p1388, %s1387, 0
        %s1390 = smul.addr %s1389, 8
        %s1391 = scalar_lea.vmem %s6, %s1390
      $region72: #{projectile_forward.1} parent=67 // pred_fallthru
        _
    $region68: #{projectile_forward.1} parent=5 // pred_fallthru
      _
  $region6: #{projectile_forward.1} parent=0 // loop_footer
    %s16 = sadd.s32 1, %s12
  $region7: #{projectile_forward.1} parent=0 // loop_footer_branch
    %11 = sbr.rel target = $region3
  $region8: #{projectile_forward.1} parent=0 // loop_exit
    _

</llo_original>
